<compile_context>
chip_gen: v7x
topology: tpu7x:2x2x1
jax: 0.10.0
libtpu: 0.0.40
codegen_flags: <defaults>
</compile_context>

<pallas_src>
import jax
import jax.numpy as jnp
from jax import lax
from jax.experimental import pallas as pl
from jax.experimental.pallas import tpu as pltpu


_MASK_NEG = -1e30  # finite "-inf": keeps fully-masked rows NaN-free


def _round_up(x, m):
    return (x + m - 1) // m * m


# ---------------------------------------------------------------------------
# fused Pallas kernel: transition (C,C), emission (C,Vp), start (1,C)
# ---------------------------------------------------------------------------

def _residual(x_bf16, w1, b1, w2, b2):
    # ResidualLayerOld (eval): relu(lin2(relu(lin1(x)))) + x   (dropout = id)
    # bf16 MXU inputs, f32 accumulation; zero-padded hidden lanes stay exactly 0.
    h = jnp.dot(x_bf16, w1, preferred_element_type=jnp.float32) + b1
    h = jnp.maximum(h, 0.0)
    h = jnp.dot(h.astype(jnp.bfloat16), w2, preferred_element_type=jnp.float32) + b2
    h = jnp.maximum(h, 0.0)
    return h + x_bf16            # f32 + bf16 -> f32 accumulation for the skip


def _log_softmax_rows(x):
    m = jnp.max(x, axis=-1, keepdims=True)
    lse = m + jnp.log(jnp.sum(jnp.exp(x - m), axis=-1, keepdims=True))
    return x - lse


def _hmm_params_kernel(
        state_emb_ref, pret_emb_ref, start_emb_ref,
        tr_w1_ref, tr_b1_ref, tr_w2_ref, tr_b2_ref, proj_ref,
        te_w1_ref, te_b1_ref, te_w2_ref, te_b2_ref, te_wo_ref, te_bo_ref,
        emask_ref,
        st_w1_ref, st_b1_ref, st_w2_ref, st_b2_ref, st_wl_ref,
        trans_ref, emit_ref, start_ref):
    # ---- transition[C, C] = log_softmax(trans_mlp(state_emb) @ proj.T) ----
    xt = _residual(state_emb_ref[...], tr_w1_ref[...], tr_b1_ref[...],
                   tr_w2_ref[...], tr_b2_ref[...])
    t_logits = jnp.dot(xt.astype(jnp.bfloat16), proj_ref[...],
                       preferred_element_type=jnp.float32)
    trans_ref[...] = _log_softmax_rows(t_logits)

    # ---- emission[C, Vp] = log_softmax(masked terminal_mlp(pret_emb)) ----
    # int8 {0,1} allowed-map expanded to a -1e30 fill with one VPU select;
    # masking + log-softmax stay in f32 (mask dominance depends on it).
    xe = _residual(pret_emb_ref[...], te_w1_ref[...], te_b1_ref[...],
                   te_w2_ref[...], te_b2_ref[...])
    e_logits = jnp.dot(xe.astype(jnp.bfloat16), te_wo_ref[...],
                       preferred_element_type=jnp.float32) + te_bo_ref[...]
    e_logits = jnp.where(emask_ref[...] != 0, e_logits, _MASK_NEG)
    emit_ref[...] = _log_softmax_rows(e_logits)

    # ---- start[1, C] = log_softmax(start_mlp(start_emb).squeeze(-1)) -------
    # Lane-dense (1, C) row via a trans-B dot (wl held as an 8-row slab, only
    # row 0 real).  The final Linear(H,1) scalar bias cancels under the
    # log_softmax over C, so it is dropped.  (Low priority per review.)
    xs = _residual(start_emb_ref[...], st_w1_ref[...], st_b1_ref[...],
                   st_w2_ref[...], st_b2_ref[...])
    s_all = lax.dot_general(st_wl_ref[...], xs.astype(jnp.bfloat16),
                            (((1,), (1,)), ((), ())),
                            preferred_element_type=jnp.float32)      # (8, C)
    start_ref[...] = _log_softmax_rows(s_all[0:1, :])                # (1, C)


def hmm_parameters(p):
    """One fused pallas_call -> (transition (C,C), emission (C,Vp), start (C,))."""
    C = p["state_emb"].shape[0]
    Vp = p["te_wo"].shape[1]
    args = (p["state_emb"], p["preterminal_emb"], p["start_emb"],
            p["tr_w1"], p["tr_b1"], p["tr_w2"], p["tr_b2"], p["next_state_proj_t"],
            p["te_w1"], p["te_b1"], p["te_w2"], p["te_b2"], p["te_wo"], p["te_bo"],
            p["emission_mask"],
            p["st_w1"], p["st_b1"], p["st_w2"], p["st_b2"], p["st_wl"])
    transition, emission, start_row = pl.pallas_call(
        _hmm_params_kernel,
        out_shape=(jax.ShapeDtypeStruct((C, C), jnp.float32),
                   jax.ShapeDtypeStruct((C, Vp), jnp.float32),
                   jax.ShapeDtypeStruct((1, C), jnp.float32)),
        # no grid / no BlockSpecs: every operand is one whole-array VMEM block
        # (everything is tiny), so there is no per-grid-step bookkeeping and
        # all operands arrive in a single DMA batch.
        compiler_params=pltpu.CompilerParams(vmem_limit_bytes=32 * 1024 * 1024),
    )(*args)
    return transition, emission, start_row[0]


# ---------------------------------------------------------------------------
# clamp(): data-dependent lookups -> log potentials  (plain-JAX glue)
#   transition term: row-gather + one-hot column-select (batched MXU matmul)
#   emission  term: per-word (V, spw) table built once, row-gather per token
# ---------------------------------------------------------------------------

def clamp(text, start, transition, emission_padded, word2state):
    V, spw = word2state.shape
    C = transition.shape[1]
    cs = word2state[text]                                            # (B, T, spw)

    # lp[b,t,i,j] = transition[cs[b,t,i], cs[b,t+1,j]]
    rows = transition[cs[:, :-1]]                                    # (B, T-1, spw, C)
    onehot_next = (cs[:, 1:, :, None] ==
                   jnp.arange(C, dtype=cs.dtype)[None, None, None, :]
                   ).astype(transition.dtype)                        # (B, T-1, spw, C)
    lp = jnp.einsum('btic,btjc->btij', rows, onehot_next)            # (B, T-1, spw, spw)

    # obs[b,t,i] = emission[word2state[w,i], w],  w = text[b,t]
    obs_table = emission_padded[word2state,
                                jnp.arange(V, dtype=cs.dtype)[:, None]]  # (V, spw)
    obs = obs_table[text]                                            # (B, T, spw)

    init = start[cs[:, 0]]                                           # (B, spw)
    lp = lp.at[:, 0].add(init[:, :, None])
    lp = lp + obs[:, 1:, None, :]
    lp = lp.at[:, 0].add(obs[:, 0][:, :, None])
    return jnp.swapaxes(lp, -1, -2)                                  # (B, T-1, spw, spw)


def mshmm_forward(text, params, word2state):
    transition, emission_padded, start = hmm_parameters(params)
    # NOTE: no `emission[:, :V]` slice on the hot path — the padded columns
    # carry -1e30-masked log-probs and are never indexed by clamp().
    log_potentials = clamp(text, start, transition, emission_padded, word2state)
    return log_potentials, start, transition, emission_padded


# ---------------------------------------------------------------------------
# deterministic parameter construction (natural sizes) + one-time padding
# ---------------------------------------------------------------------------

def _init_raw_params(key, C, H, Vsz):
    ks = jax.random.split(key, 12)

    def w(k, shape, fan_in):
        return jax.random.normal(k, shape, jnp.float32) / jnp.sqrt(fan_in)

    return dict(
        start_emb=jax.random.normal(ks[0], (C, H), jnp.float32),
        state_emb=jax.random.normal(ks[1], (C, H), jnp.float32),
        preterminal_emb=jax.random.normal(ks[2], (C, H), jnp.float32),
        # start_mlp: ResidualLayer(H,H) + Linear(H,1)  (its bias cancels in log_softmax)
        st_w1=w(ks[3], (H, H), H), st_b1=jnp.zeros((1, H), jnp.float32),
        st_w2=w(ks[4], (H, H), H), st_b2=jnp.zeros((1, H), jnp.float32),
        st_wl=w(ks[5], (H, 1), H),
        # trans_mlp: ResidualLayer(H,H);  next_state_proj: Linear(H,C,bias=False)
        tr_w1=w(ks[6], (H, H), H), tr_b1=jnp.zeros((1, H), jnp.float32),
        tr_w2=w(ks[7], (H, H), H), tr_b2=jnp.zeros((1, H), jnp.float32),
        next_state_proj_t=w(ks[8], (H, C), H),
        # terminal_mlp: ResidualLayer(H,H) + Linear(H, V)
        te_w1=w(ks[9], (H, H), H), te_b1=jnp.zeros((1, H), jnp.float32),
        te_w2=w(ks[10], (H, H), H), te_b2=jnp.zeros((1, H), jnp.float32),
        te_wo=w(ks[11], (H, Vsz), H), te_bo=jnp.zeros((1, Vsz), jnp.float32),
    )


def _pad2(a, rows, cols):
    out = jnp.zeros((rows, cols), a.dtype)
    return out.at[:a.shape[0], :a.shape[1]].set(a)


def prepare_params(raw, word2state):
    """One-time padding / casting for the kernel.

    * H and V are zero-padded up to the 128-lane width (full-lane vregs,
      full-depth MXU K); padding is exact: padded hidden lanes stay 0 through
      relu/residual, padded vocab columns are masked to -1e30 in-kernel.
    * Embeddings and MXU weight operands are stored bf16 ([in, out] layout),
      f32 accumulation keeps the log-softmax numerics.
    * Emission allowed-map stored as int8 {0,1} (4x smaller than f32 mask).
    """
    C, H = raw["state_emb"].shape
    V = raw["te_wo"].shape[1]
    Hp = _round_up(H, 128)
    Vp = _round_up(V, 128)
    bf16 = jnp.bfloat16

    p = dict(
        state_emb=_pad2(raw["state_emb"], C, Hp).astype(bf16),
        preterminal_emb=_pad2(raw["preterminal_emb"], C, Hp).astype(bf16),
        start_emb=_pad2(raw["start_emb"], C, Hp).astype(bf16),
        tr_w1=_pad2(raw["tr_w1"], Hp, Hp).astype(bf16),
        tr_b1=_pad2(raw["tr_b1"], 1, Hp),
        tr_w2=_pad2(raw["tr_w2"], Hp, Hp).astype(bf16),
        tr_b2=_pad2(raw["tr_b2"], 1, Hp),
        next_state_proj_t=_pad2(raw["next_state_proj_t"], Hp, C).astype(bf16),
        te_w1=_pad2(raw["te_w1"], Hp, Hp).astype(bf16),
        te_b1=_pad2(raw["te_b1"], 1, Hp),
        te_w2=_pad2(raw["te_w2"], Hp, Hp).astype(bf16),
        te_b2=_pad2(raw["te_b2"], 1, Hp),
        te_wo=_pad2(raw["te_wo"], Hp, Vp).astype(bf16),
        te_bo=_pad2(raw["te_bo"], 1, Vp),
        st_w1=_pad2(raw["st_w1"], Hp, Hp).astype(bf16),
        st_b1=_pad2(raw["st_b1"], 1, Hp),
        st_w2=_pad2(raw["st_w2"], Hp, Hp).astype(bf16),
        st_b2=_pad2(raw["st_b2"], 1, Hp),
        # Linear(H,1) weight as a lane-dense row, padded to an 8-row slab
        st_wl=_pad2(raw["st_wl"].T, 8, Hp).astype(bf16),
    )
    # int8 allowed-map: 1 where (state, word) allowed, 0 elsewhere
    # (including the padded vocab columns >= V).
    V_idx = jnp.arange(V, dtype=jnp.int32)[:, None]
    emask = jnp.zeros((C, Vp), jnp.int8).at[word2state, V_idx].set(1)
    p["emission_mask"] = emask
    return p


if __name__ == "__main__":
    # small config consistent with the module:
    #   C (num_classes)=128, hidden_dim=32, |V|=64,
    #   states_per_word=8, num_clusters=16  (spw * num_clusters <= C)
    C, H, Vsz, spw, ncl = 128, 32, 64, 8, 16
    B, T = 2, 8

    key = jax.random.PRNGKey(0)
    kp, kt = jax.random.split(key)
    raw = _init_raw_params(kp, C, H, Vsz)

    # synthetic Brown-cluster assignment (deterministic, every state used)
    word2cluster = jnp.arange(Vsz, dtype=jnp.int32) % ncl
    cluster2state = (jnp.arange(ncl, dtype=jnp.int32)[:, None] * spw
                     + jnp.arange(spw, dtype=jnp.int32)[None, :])       # (ncl, spw)
    word2state = cluster2state[word2cluster]                            # (Vsz, spw)

    params = prepare_params(raw, word2state)
    text = jax.random.randint(kt, (B, T), 0, Vsz, dtype=jnp.int32)

    fwd = jax.jit(mshmm_forward)
    log_potentials, start, transition, emission_padded = fwd(text, params, word2state)
    jax.block_until_ready((log_potentials, start, transition, emission_padded))

    # shape + normalization sanity checks (vocab slice only here, off the hot path)
    emission = emission_padded[:, :Vsz]
    assert log_potentials.shape == (B, T - 1, spw, spw)
    assert transition.shape == (C, C) and emission.shape == (C, Vsz)
    assert start.shape == (C,)
    assert jnp.max(jnp.abs(jax.nn.logsumexp(transition, axis=-1))) < 1e-3
    assert jnp.max(jnp.abs(jax.nn.logsumexp(emission, axis=-1))) < 1e-3
    assert jnp.abs(jax.nn.logsumexp(start)) < 1e-3
    assert bool(jnp.all(jnp.isfinite(log_potentials)))
    print("KERNEL_OK")
</pallas_src>

<mosaic_0001>
module attributes {stable_mosaic.version = 11 : i64} {
  func.func @_hmm_params_kernel(%arg0: memref<128x128xbf16, #tpu.memory_space<vmem>>, %arg1: memref<128x128xbf16, #tpu.memory_space<vmem>>, %arg2: memref<128x128xbf16, #tpu.memory_space<vmem>>, %arg3: memref<128x128xbf16, #tpu.memory_space<vmem>>, %arg4: memref<1x128xf32, #tpu.memory_space<vmem>>, %arg5: memref<128x128xbf16, #tpu.memory_space<vmem>>, %arg6: memref<1x128xf32, #tpu.memory_space<vmem>>, %arg7: memref<128x128xbf16, #tpu.memory_space<vmem>>, %arg8: memref<128x128xbf16, #tpu.memory_space<vmem>>, %arg9: memref<1x128xf32, #tpu.memory_space<vmem>>, %arg10: memref<128x128xbf16, #tpu.memory_space<vmem>>, %arg11: memref<1x128xf32, #tpu.memory_space<vmem>>, %arg12: memref<128x128xbf16, #tpu.memory_space<vmem>>, %arg13: memref<1x128xf32, #tpu.memory_space<vmem>>, %arg14: memref<128x128xi8, #tpu.memory_space<vmem>>, %arg15: memref<128x128xbf16, #tpu.memory_space<vmem>>, %arg16: memref<1x128xf32, #tpu.memory_space<vmem>>, %arg17: memref<128x128xbf16, #tpu.memory_space<vmem>>, %arg18: memref<1x128xf32, #tpu.memory_space<vmem>>, %arg19: memref<8x128xbf16, #tpu.memory_space<vmem>>, %arg20: memref<128x128xf32, #tpu.memory_space<vmem>>, %arg21: memref<128x128xf32, #tpu.memory_space<vmem>>, %arg22: memref<1x128xf32, #tpu.memory_space<vmem>>) attributes {dimension_semantics = [], scalar_prefetch = 0 : i64, scratch_operands = 0 : i64, tpu.core_type = #tpu.core_type<tc>} {
    %c0 = arith.constant 0 : index
    %c0_0 = arith.constant 0 : index
    %0 = vector.load %arg0[%c0, %c0_0] : memref<128x128xbf16, #tpu.memory_space<vmem>>, vector<128x128xbf16>
    %c0_1 = arith.constant 0 : index
    %c0_2 = arith.constant 0 : index
    %1 = vector.load %arg3[%c0_1, %c0_2] : memref<128x128xbf16, #tpu.memory_space<vmem>>, vector<128x128xbf16>
    %c0_3 = arith.constant 0 : index
    %c0_4 = arith.constant 0 : index
    %2 = vector.load %arg4[%c0_3, %c0_4] : memref<1x128xf32, #tpu.memory_space<vmem>>, vector<1x128xf32>
    %c0_5 = arith.constant 0 : index
    %c0_6 = arith.constant 0 : index
    %3 = vector.load %arg5[%c0_5, %c0_6] : memref<128x128xbf16, #tpu.memory_space<vmem>>, vector<128x128xbf16>
    %c0_7 = arith.constant 0 : index
    %c0_8 = arith.constant 0 : index
    %4 = vector.load %arg6[%c0_7, %c0_8] : memref<1x128xf32, #tpu.memory_space<vmem>>, vector<1x128xf32>
    %cst = arith.constant dense<0.000000e+00> : vector<128x128xf32>
    %5 = tpu.matmul %0, %1, %cst {dimension_numbers = #tpu.dot_dimension_numbers<[1], [0], [0], [1], [0, 0, 1, 1], [], []>} : vector<128x128xbf16>, vector<128x128xbf16>, vector<128x128xf32> -> vector<128x128xf32>
    %6 = vector.broadcast %2 : vector<1x128xf32> to vector<128x128xf32>
    %7 = arith.addf %5, %6 : vector<128x128xf32>
    %cst_9 = arith.constant 0.000000e+00 : f32
    %8 = vector.broadcast %cst_9 : f32 to vector<128x128xf32>
    %9 = arith.maximumf %7, %8 : vector<128x128xf32>
    %10 = arith.truncf %9 : vector<128x128xf32> to vector<128x128xbf16>
    %cst_10 = arith.constant dense<0.000000e+00> : vector<128x128xf32>
    %11 = tpu.matmul %10, %3, %cst_10 {dimension_numbers = #tpu.dot_dimension_numbers<[1], [0], [0], [1], [0, 0, 1, 1], [], []>} : vector<128x128xbf16>, vector<128x128xbf16>, vector<128x128xf32> -> vector<128x128xf32>
    %12 = vector.broadcast %4 : vector<1x128xf32> to vector<128x128xf32>
    %13 = arith.addf %11, %12 : vector<128x128xf32>
    %cst_11 = arith.constant 0.000000e+00 : f32
    %14 = vector.broadcast %cst_11 : f32 to vector<128x128xf32>
    %15 = arith.maximumf %13, %14 : vector<128x128xf32>
    %16 = arith.extf %0 : vector<128x128xbf16> to vector<128x128xf32>
    %17 = arith.addf %15, %16 : vector<128x128xf32>
    %18 = arith.truncf %17 : vector<128x128xf32> to vector<128x128xbf16>
    %c0_12 = arith.constant 0 : index
    %c0_13 = arith.constant 0 : index
    %19 = vector.load %arg7[%c0_12, %c0_13] : memref<128x128xbf16, #tpu.memory_space<vmem>>, vector<128x128xbf16>
    %cst_14 = arith.constant dense<0.000000e+00> : vector<128x128xf32>
    %20 = tpu.matmul %18, %19, %cst_14 {dimension_numbers = #tpu.dot_dimension_numbers<[1], [0], [0], [1], [0, 0, 1, 1], [], []>} : vector<128x128xbf16>, vector<128x128xbf16>, vector<128x128xf32> -> vector<128x128xf32>
    %cst_15 = arith.constant dense<0xFF800000> : vector<128xf32>
    %21 = vector.multi_reduction <maximumf>, %20, %cst_15 [1] : vector<128x128xf32> to vector<128xf32>
    %22 = vector.shape_cast %21 : vector<128xf32> to vector<128x1xf32>
    %23 = vector.broadcast %22 : vector<128x1xf32> to vector<128x128xf32>
    %24 = arith.subf %20, %23 : vector<128x128xf32>
    %25 = math.exp %24 : vector<128x128xf32>
    %cst_16 = arith.constant dense<0.000000e+00> : vector<128xf32>
    %26 = vector.multi_reduction <add>, %25, %cst_16 [1] : vector<128x128xf32> to vector<128xf32>
    %27 = vector.shape_cast %26 : vector<128xf32> to vector<128x1xf32>
    %28 = math.log %27 : vector<128x1xf32>
    %29 = arith.addf %22, %28 : vector<128x1xf32>
    %30 = vector.broadcast %29 : vector<128x1xf32> to vector<128x128xf32>
    %31 = arith.subf %20, %30 : vector<128x128xf32>
    %c0_17 = arith.constant 0 : index
    %c0_18 = arith.constant 0 : index
    %32 = vector.load %arg20[%c0_17, %c0_18] : memref<128x128xf32, #tpu.memory_space<vmem>>, vector<128x128xf32>
    tpu.vector_store %arg20[%c0_17, %c0_18], %31 {strides = array<i32>} : memref<128x128xf32, #tpu.memory_space<vmem>>, vector<128x128xf32>,
    %c0_19 = arith.constant 0 : index
    %c0_20 = arith.constant 0 : index
    %33 = vector.load %arg1[%c0_19, %c0_20] : memref<128x128xbf16, #tpu.memory_space<vmem>>, vector<128x128xbf16>
    %c0_21 = arith.constant 0 : index
    %c0_22 = arith.constant 0 : index
    %34 = vector.load %arg8[%c0_21, %c0_22] : memref<128x128xbf16, #tpu.memory_space<vmem>>, vector<128x128xbf16>
    %c0_23 = arith.constant 0 : index
    %c0_24 = arith.constant 0 : index
    %35 = vector.load %arg9[%c0_23, %c0_24] : memref<1x128xf32, #tpu.memory_space<vmem>>, vector<1x128xf32>
    %c0_25 = arith.constant 0 : index
    %c0_26 = arith.constant 0 : index
    %36 = vector.load %arg10[%c0_25, %c0_26] : memref<128x128xbf16, #tpu.memory_space<vmem>>, vector<128x128xbf16>
    %c0_27 = arith.constant 0 : index
    %c0_28 = arith.constant 0 : index
    %37 = vector.load %arg11[%c0_27, %c0_28] : memref<1x128xf32, #tpu.memory_space<vmem>>, vector<1x128xf32>
    %cst_29 = arith.constant dense<0.000000e+00> : vector<128x128xf32>
    %38 = tpu.matmul %33, %34, %cst_29 {dimension_numbers = #tpu.dot_dimension_numbers<[1], [0], [0], [1], [0, 0, 1, 1], [], []>} : vector<128x128xbf16>, vector<128x128xbf16>, vector<128x128xf32> -> vector<128x128xf32>
    %39 = vector.broadcast %35 : vector<1x128xf32> to vector<128x128xf32>
    %40 = arith.addf %38, %39 : vector<128x128xf32>
    %cst_30 = arith.constant 0.000000e+00 : f32
    %41 = vector.broadcast %cst_30 : f32 to vector<128x128xf32>
    %42 = arith.maximumf %40, %41 : vector<128x128xf32>
    %43 = arith.truncf %42 : vector<128x128xf32> to vector<128x128xbf16>
    %cst_31 = arith.constant dense<0.000000e+00> : vector<128x128xf32>
    %44 = tpu.matmul %43, %36, %cst_31 {dimension_numbers = #tpu.dot_dimension_numbers<[1], [0], [0], [1], [0, 0, 1, 1], [], []>} : vector<128x128xbf16>, vector<128x128xbf16>, vector<128x128xf32> -> vector<128x128xf32>
    %45 = vector.broadcast %37 : vector<1x128xf32> to vector<128x128xf32>
    %46 = arith.addf %44, %45 : vector<128x128xf32>
    %cst_32 = arith.constant 0.000000e+00 : f32
    %47 = vector.broadcast %cst_32 : f32 to vector<128x128xf32>
    %48 = arith.maximumf %46, %47 : vector<128x128xf32>
    %49 = arith.extf %33 : vector<128x128xbf16> to vector<128x128xf32>
    %50 = arith.addf %48, %49 : vector<128x128xf32>
    %51 = arith.truncf %50 : vector<128x128xf32> to vector<128x128xbf16>
    %c0_33 = arith.constant 0 : index
    %c0_34 = arith.constant 0 : index
    %52 = vector.load %arg12[%c0_33, %c0_34] : memref<128x128xbf16, #tpu.memory_space<vmem>>, vector<128x128xbf16>
    %cst_35 = arith.constant dense<0.000000e+00> : vector<128x128xf32>
    %53 = tpu.matmul %51, %52, %cst_35 {dimension_numbers = #tpu.dot_dimension_numbers<[1], [0], [0], [1], [0, 0, 1, 1], [], []>} : vector<128x128xbf16>, vector<128x128xbf16>, vector<128x128xf32> -> vector<128x128xf32>
    %c0_36 = arith.constant 0 : index
    %c0_37 = arith.constant 0 : index
    %54 = vector.load %arg13[%c0_36, %c0_37] : memref<1x128xf32, #tpu.memory_space<vmem>>, vector<1x128xf32>
    %55 = vector.broadcast %54 : vector<1x128xf32> to vector<128x128xf32>
    %56 = arith.addf %53, %55 : vector<128x128xf32>
    %c0_38 = arith.constant 0 : index
    %c0_39 = arith.constant 0 : index
    %57 = vector.load %arg14[%c0_38, %c0_39] : memref<128x128xi8, #tpu.memory_space<vmem>>, vector<128x128xi8>
    %c0_i8 = arith.constant 0 : i8
    %58 = vector.broadcast %c0_i8 : i8 to vector<128x128xi8>
    %59 = arith.cmpi ne, %57, %58 : vector<128x128xi8>
    %cst_40 = arith.constant -1.000000e+30 : f32
    %60 = vector.broadcast %cst_40 : f32 to vector<128x128xf32>
    %61 = arith.select %59, %56, %60 : vector<128x128xi1>, vector<128x128xf32>
    %cst_41 = arith.constant dense<0xFF800000> : vector<128xf32>
    %62 = vector.multi_reduction <maximumf>, %61, %cst_41 [1] : vector<128x128xf32> to vector<128xf32>
    %63 = vector.shape_cast %62 : vector<128xf32> to vector<128x1xf32>
    %64 = vector.broadcast %63 : vector<128x1xf32> to vector<128x128xf32>
    %65 = arith.subf %61, %64 : vector<128x128xf32>
    %66 = math.exp %65 : vector<128x128xf32>
    %cst_42 = arith.constant dense<0.000000e+00> : vector<128xf32>
    %67 = vector.multi_reduction <add>, %66, %cst_42 [1] : vector<128x128xf32> to vector<128xf32>
    %68 = vector.shape_cast %67 : vector<128xf32> to vector<128x1xf32>
    %69 = math.log %68 : vector<128x1xf32>
    %70 = arith.addf %63, %69 : vector<128x1xf32>
    %71 = vector.broadcast %70 : vector<128x1xf32> to vector<128x128xf32>
    %72 = arith.subf %61, %71 : vector<128x128xf32>
    %c0_43 = arith.constant 0 : index
    %c0_44 = arith.constant 0 : index
    %73 = vector.load %arg21[%c0_43, %c0_44] : memref<128x128xf32, #tpu.memory_space<vmem>>, vector<128x128xf32>
    tpu.vector_store %arg21[%c0_43, %c0_44], %72 {strides = array<i32>} : memref<128x128xf32, #tpu.memory_space<vmem>>, vector<128x128xf32>,
    %c0_45 = arith.constant 0 : index
    %c0_46 = arith.constant 0 : index
    %74 = vector.load %arg2[%c0_45, %c0_46] : memref<128x128xbf16, #tpu.memory_space<vmem>>, vector<128x128xbf16>
    %c0_47 = arith.constant 0 : index
    %c0_48 = arith.constant 0 : index
    %75 = vector.load %arg15[%c0_47, %c0_48] : memref<128x128xbf16, #tpu.memory_space<vmem>>, vector<128x128xbf16>
    %c0_49 = arith.constant 0 : index
    %c0_50 = arith.constant 0 : index
    %76 = vector.load %arg16[%c0_49, %c0_50] : memref<1x128xf32, #tpu.memory_space<vmem>>, vector<1x128xf32>
    %c0_51 = arith.constant 0 : index
    %c0_52 = arith.constant 0 : index
    %77 = vector.load %arg17[%c0_51, %c0_52] : memref<128x128xbf16, #tpu.memory_space<vmem>>, vector<128x128xbf16>
    %c0_53 = arith.constant 0 : index
    %c0_54 = arith.constant 0 : index
    %78 = vector.load %arg18[%c0_53, %c0_54] : memref<1x128xf32, #tpu.memory_space<vmem>>, vector<1x128xf32>
    %cst_55 = arith.constant dense<0.000000e+00> : vector<128x128xf32>
    %79 = tpu.matmul %74, %75, %cst_55 {dimension_numbers = #tpu.dot_dimension_numbers<[1], [0], [0], [1], [0, 0, 1, 1], [], []>} : vector<128x128xbf16>, vector<128x128xbf16>, vector<128x128xf32> -> vector<128x128xf32>
    %80 = vector.broadcast %76 : vector<1x128xf32> to vector<128x128xf32>
    %81 = arith.addf %79, %80 : vector<128x128xf32>
    %cst_56 = arith.constant 0.000000e+00 : f32
    %82 = vector.broadcast %cst_56 : f32 to vector<128x128xf32>
    %83 = arith.maximumf %81, %82 : vector<128x128xf32>
    %84 = arith.truncf %83 : vector<128x128xf32> to vector<128x128xbf16>
    %cst_57 = arith.constant dense<0.000000e+00> : vector<128x128xf32>
    %85 = tpu.matmul %84, %77, %cst_57 {dimension_numbers = #tpu.dot_dimension_numbers<[1], [0], [0], [1], [0, 0, 1, 1], [], []>} : vector<128x128xbf16>, vector<128x128xbf16>, vector<128x128xf32> -> vector<128x128xf32>
    %86 = vector.broadcast %78 : vector<1x128xf32> to vector<128x128xf32>
    %87 = arith.addf %85, %86 : vector<128x128xf32>
    %cst_58 = arith.constant 0.000000e+00 : f32
    %88 = vector.broadcast %cst_58 : f32 to vector<128x128xf32>
    %89 = arith.maximumf %87, %88 : vector<128x128xf32>
    %90 = arith.extf %74 : vector<128x128xbf16> to vector<128x128xf32>
    %91 = arith.addf %89, %90 : vector<128x128xf32>
    %c0_59 = arith.constant 0 : index
    %c0_60 = arith.constant 0 : index
    %92 = vector.load %arg19[%c0_59, %c0_60] : memref<8x128xbf16, #tpu.memory_space<vmem>>, vector<8x128xbf16>
    %93 = arith.truncf %91 : vector<128x128xf32> to vector<128x128xbf16>
    %cst_61 = arith.constant dense<0.000000e+00> : vector<8x128xf32>
    %94 = tpu.matmul %92, %93, %cst_61 {dimension_numbers = #tpu.dot_dimension_numbers<[1], [1], [0], [0], [0, 0, 1, 0], [], []>} : vector<8x128xbf16>, vector<128x128xbf16>, vector<8x128xf32> -> vector<8x128xf32>
    %95 = vector.extract_strided_slice %94 {offsets = [0, 0], sizes = [1, 128], strides = [1, 1]} : vector<8x128xf32> to vector<1x128xf32>
    %cst_62 = arith.constant dense<0xFF800000> : vector<1xf32>
    %96 = vector.multi_reduction <maximumf>, %95, %cst_62 [1] : vector<1x128xf32> to vector<1xf32>
    %97 = vector.shape_cast %96 : vector<1xf32> to vector<1x1xf32>
    %98 = vector.broadcast %97 : vector<1x1xf32> to vector<1x128xf32>
    %99 = arith.subf %95, %98 : vector<1x128xf32>
    %100 = math.exp %99 : vector<1x128xf32>
    %cst_63 = arith.constant dense<0.000000e+00> : vector<1xf32>
    %101 = vector.multi_reduction <add>, %100, %cst_63 [1] : vector<1x128xf32> to vector<1xf32>
    %102 = vector.shape_cast %101 : vector<1xf32> to vector<1x1xf32>
    %103 = math.log %102 : vector<1x1xf32>
    %104 = arith.addf %97, %103 : vector<1x1xf32>
    %105 = vector.broadcast %104 : vector<1x1xf32> to vector<1x128xf32>
    %106 = arith.subf %95, %105 : vector<1x128xf32>
    %c0_64 = arith.constant 0 : index
    %c0_65 = arith.constant 0 : index
    %107 = vector.load %arg22[%c0_64, %c0_65] : memref<1x128xf32, #tpu.memory_space<vmem>>, vector<1x128xf32>
    tpu.vector_store %arg22[%c0_64, %c0_65], %106 {strides = array<i32>} : memref<1x128xf32, #tpu.memory_space<vmem>>, vector<1x128xf32>,
    return
  }
}

</mosaic_0001>

<llo_original>
// kernel: mshmm_forward.1
$region0: #{mshmm_forward.1}
  #allocation0 [shape = 'u32[]', space=smem, size = 0x4, offset = 0x4, fixed_abs, tag = 'smem constant byte address 0x4 - core index']
  #allocation1 [shape = 'u32[144,128]{1,0:T(1,128)}', space=vmem, size = 0x12000, scoped, tag = 'internal scratch']
  %s0 = inlined_call_operand.vmem [shape: bf16[128,128], index: 0, kind: input, shape index: {}]
  %s1 = inlined_call_operand.vmem [shape: bf16[128,128], index: 1, kind: input, shape index: {}]
  %s2 = inlined_call_operand.vmem [shape: bf16[128,128], index: 2, kind: input, shape index: {}]
  %s3 = inlined_call_operand.vmem [shape: bf16[128,128], index: 3, kind: input, shape index: {}]
  %s4 = inlined_call_operand.vmem [shape: f32[1,128], index: 4, kind: input, shape index: {}]
  %s5 = inlined_call_operand.vmem [shape: bf16[128,128], index: 5, kind: input, shape index: {}]
  %s6 = inlined_call_operand.vmem [shape: f32[1,128], index: 6, kind: input, shape index: {}]
  %s7 = inlined_call_operand.vmem [shape: bf16[128,128], index: 7, kind: input, shape index: {}]
  %s8 = inlined_call_operand.vmem [shape: bf16[128,128], index: 8, kind: input, shape index: {}]
  %s9 = inlined_call_operand.vmem [shape: f32[1,128], index: 9, kind: input, shape index: {}]
  %s10 = inlined_call_operand.vmem [shape: bf16[128,128], index: 10, kind: input, shape index: {}]
  %s11 = inlined_call_operand.vmem [shape: f32[1,128], index: 11, kind: input, shape index: {}]
  %s12 = inlined_call_operand.vmem [shape: bf16[128,128], index: 12, kind: input, shape index: {}]
  %s13 = inlined_call_operand.vmem [shape: f32[1,128], index: 13, kind: input, shape index: {}]
  %s14 = inlined_call_operand.vmem [shape: s8[128,128], index: 14, kind: input, shape index: {}]
  %s15 = inlined_call_operand.hbm [shape: bf16[128,128], index: 15, kind: input, shape index: {}]
  %s16 = inlined_call_operand.vmem [shape: f32[1,128], index: 16, kind: input, shape index: {}]
  %s17 = inlined_call_operand.hbm [shape: bf16[128,128], index: 17, kind: input, shape index: {}]
  %s18 = inlined_call_operand.vmem [shape: f32[1,128], index: 18, kind: input, shape index: {}]
  %s19 = inlined_call_operand.vmem [shape: bf16[8,128], index: 19, kind: input, shape index: {}]
  %s20 = inlined_call_operand.vmem [shape: f32[128,128], index: 20, kind: output, shape index: {0}]
  %s21 = inlined_call_operand.vmem [shape: f32[128,128], index: 21, kind: output, shape index: {1}]
  %s22 = inlined_call_operand.vmem [shape: f32[1,128], index: 22, kind: output, shape index: {2}]
  %23 = xla_tuple %s20, %s21, %s22
  %s24 = sld [smem:[#allocation0]]
  $region114: #{mshmm_forward.1} parent=0
    _
  %s26 = ssub.s32 1, %s24
  %s27 = scalar_select 0, %s26, %s24
  $region1: #{mshmm_forward.1} parent=0
    #allocation2 [shape = 'u8[32768]{0}', space=vmem, size = 0x8000, scoped, tag = 'input window, operand 15, single buffered']
    #allocation3 [shape = 's32[1]{0}', space=sflag, size = 0x4, scoped, tag = 'scoped memory for mshmm_forward.1']
    #allocation4 [shape = 'u8[32768]{0}', space=vmem, size = 0x8000, scoped, tag = 'input window, operand 17, single buffered']
    #allocation5 [shape = 's32[1]{0}', space=sflag, size = 0x4, scoped, tag = 'scoped memory for mshmm_forward.1']
    %28 = vsyncpa [#allocation3], 0
    %29 = vsyncpa [#allocation5], 0
    // Predicated region
    $region2: #{mshmm_forward.1} parent=1 // pred_check
      _
    $region3: #{mshmm_forward.1} parent=1 // pred_check_branch
      %31 = sbr.rel (0) target = $region5
    $region4: #{mshmm_forward.1} parent=1 // pred_region
      _
    $region5: #{mshmm_forward.1} parent=1 // pred_fallthru
      _
    // Predicated region
    $region6: #{mshmm_forward.1} parent=1 // pred_check
      _
    $region7: #{mshmm_forward.1} parent=1 // pred_check_branch
      %33 = sbr.rel (0) target = $region9
    $region8: #{mshmm_forward.1} parent=1 // pred_region
      _
    $region9: #{mshmm_forward.1} parent=1 // pred_fallthru
      _
    // Predicated region
    $region10: #{mshmm_forward.1} parent=1 // pred_check
      _
    $region11: #{mshmm_forward.1} parent=1 // pred_check_branch
      %35 = sbr.rel (0) target = $region13
    $region12: #{mshmm_forward.1} parent=1 // pred_region
      _
    $region13: #{mshmm_forward.1} parent=1 // pred_fallthru
      _
    // Predicated region
    $region14: #{mshmm_forward.1} parent=1 // pred_check
      _
    $region15: #{mshmm_forward.1} parent=1 // pred_check_branch
      %37 = sbr.rel (0) target = $region17
    $region16: #{mshmm_forward.1} parent=1 // pred_region
      _
    $region17: #{mshmm_forward.1} parent=1 // pred_fallthru
      _
    // Predicated region
    $region18: #{mshmm_forward.1} parent=1 // pred_check
      _
    $region19: #{mshmm_forward.1} parent=1 // pred_check_branch
      %39 = sbr.rel (0) target = $region21
    $region20: #{mshmm_forward.1} parent=1 // pred_region
      _
    $region21: #{mshmm_forward.1} parent=1 // pred_fallthru
      _
    // Predicated region
    $region22: #{mshmm_forward.1} parent=1 // pred_check
      _
    $region23: #{mshmm_forward.1} parent=1 // pred_check_branch
      %41 = sbr.rel (0) target = $region25
    $region24: #{mshmm_forward.1} parent=1 // pred_region
      _
    $region25: #{mshmm_forward.1} parent=1 // pred_fallthru
      _
    // Predicated region
    $region26: #{mshmm_forward.1} parent=1 // pred_check
      _
    $region27: #{mshmm_forward.1} parent=1 // pred_check_branch
      %43 = sbr.rel (0) target = $region29
    $region28: #{mshmm_forward.1} parent=1 // pred_region
      _
    $region29: #{mshmm_forward.1} parent=1 // pred_fallthru
      _
    // Predicated region
    $region30: #{mshmm_forward.1} parent=1 // pred_check
      _
    $region31: #{mshmm_forward.1} parent=1 // pred_check_branch
      %45 = sbr.rel (0) target = $region33
    $region32: #{mshmm_forward.1} parent=1 // pred_region
      _
    $region33: #{mshmm_forward.1} parent=1 // pred_fallthru
      _
    // Predicated region
    $region34: #{mshmm_forward.1} parent=1 // pred_check
      _
    $region35: #{mshmm_forward.1} parent=1 // pred_check_branch
      %47 = sbr.rel (0) target = $region37
    $region36: #{mshmm_forward.1} parent=1 // pred_region
      _
    $region37: #{mshmm_forward.1} parent=1 // pred_fallthru
      _
    // Predicated region
    $region38: #{mshmm_forward.1} parent=1 // pred_check
      _
    $region39: #{mshmm_forward.1} parent=1 // pred_check_branch
      %49 = sbr.rel (0) target = $region41
    $region40: #{mshmm_forward.1} parent=1 // pred_region
      _
    $region41: #{mshmm_forward.1} parent=1 // pred_fallthru
      _
    // Predicated region
    $region42: #{mshmm_forward.1} parent=1 // pred_check
      _
    $region43: #{mshmm_forward.1} parent=1 // pred_check_branch
      %51 = sbr.rel (0) target = $region45
    $region44: #{mshmm_forward.1} parent=1 // pred_region
      _
    $region45: #{mshmm_forward.1} parent=1 // pred_fallthru
      _
    // Predicated region
    $region46: #{mshmm_forward.1} parent=1 // pred_check
      _
    $region47: #{mshmm_forward.1} parent=1 // pred_check_branch
      %53 = sbr.rel (0) target = $region49
    $region48: #{mshmm_forward.1} parent=1 // pred_region
      _
    $region49: #{mshmm_forward.1} parent=1 // pred_fallthru
      _
    // Predicated region
    $region50: #{mshmm_forward.1} parent=1 // pred_check
      _
    $region51: #{mshmm_forward.1} parent=1 // pred_check_branch
      %55 = sbr.rel (0) target = $region53
    $region52: #{mshmm_forward.1} parent=1 // pred_region
      _
    $region53: #{mshmm_forward.1} parent=1 // pred_fallthru
      _
    // Predicated region
    $region54: #{mshmm_forward.1} parent=1 // pred_check
      _
    $region55: #{mshmm_forward.1} parent=1 // pred_check_branch
      %57 = sbr.rel (0) target = $region57
    $region56: #{mshmm_forward.1} parent=1 // pred_region
      _
    $region57: #{mshmm_forward.1} parent=1 // pred_fallthru
      _
    // Predicated region
    $region58: #{mshmm_forward.1} parent=1 // pred_check
      _
    $region59: #{mshmm_forward.1} parent=1 // pred_check_branch
      %59 = sbr.rel (0) target = $region61
    $region60: #{mshmm_forward.1} parent=1 // pred_region
      _
    $region61: #{mshmm_forward.1} parent=1 // pred_fallthru
      _
    // Predicated region
    $region62: #{mshmm_forward.1} parent=1 // pred_check
      _
    $region63: #{mshmm_forward.1} parent=1 // pred_check_branch
      %61 = sbr.rel (0) target = $region65
    $region64: #{mshmm_forward.1} parent=1 // pred_region
      %s63 = ssub.s32 1024, 1024
      %64 = vsyncadd [#allocation3], %s63
      %s65 = sshll.u32 [#allocation2], 4
      %s66 = int_to_ptr.vmem [resolvable:$true] %s65
      %71 = dma.hbm_to_vmem [thread:$0]  %s15, 1024, %s66, [#allocation3], 64, 64, 4
    $region65: #{mshmm_forward.1} parent=1 // pred_fallthru
      _
    // Predicated region
    $region66: #{mshmm_forward.1} parent=1 // pred_check
      _
    $region67: #{mshmm_forward.1} parent=1 // pred_check_branch
      %73 = sbr.rel (0) target = $region69
    $region68: #{mshmm_forward.1} parent=1 // pred_region
      _
    $region69: #{mshmm_forward.1} parent=1 // pred_fallthru
      _
    // Predicated region
    $region70: #{mshmm_forward.1} parent=1 // pred_check
      _
    $region71: #{mshmm_forward.1} parent=1 // pred_check_branch
      %75 = sbr.rel (0) target = $region73
    $region72: #{mshmm_forward.1} parent=1 // pred_region
      %s77 = ssub.s32 1024, 1024
      %78 = vsyncadd [#allocation5], %s77
      %s79 = sshll.u32 [#allocation4], 4
      %s80 = int_to_ptr.vmem [resolvable:$true] %s79
      %85 = dma.hbm_to_vmem [thread:$0]  %s17, 1024, %s80, [#allocation5], 64, 64, 4
    $region73: #{mshmm_forward.1} parent=1 // pred_fallthru
      _
    // Predicated region
    $region74: #{mshmm_forward.1} parent=1 // pred_check
      _
    $region75: #{mshmm_forward.1} parent=1 // pred_check_branch
      %87 = sbr.rel (0) target = $region77
    $region76: #{mshmm_forward.1} parent=1 // pred_region
      _
    $region77: #{mshmm_forward.1} parent=1 // pred_fallthru
      _
    // Predicated region
    $region78: #{mshmm_forward.1} parent=1 // pred_check
      _
    $region79: #{mshmm_forward.1} parent=1 // pred_check_branch
      %89 = sbr.rel (0) target = $region81
    $region80: #{mshmm_forward.1} parent=1 // pred_region
      _
    $region81: #{mshmm_forward.1} parent=1 // pred_fallthru
      _
    // Predicated region
    $region82: #{mshmm_forward.1} parent=1 // pred_check
      _
    $region83: #{mshmm_forward.1} parent=1 // pred_check_branch
      %91 = sbr.rel (0) target = $region85
    $region84: #{mshmm_forward.1} parent=1 // pred_region
      %92 = dma.done [#allocation3], 1024
    $region85: #{mshmm_forward.1} parent=1 // pred_fallthru
      _
    // Predicated region
    $region86: #{mshmm_forward.1} parent=1 // pred_check
      _
    $region87: #{mshmm_forward.1} parent=1 // pred_check_branch
      %94 = sbr.rel (0) target = $region89
    $region88: #{mshmm_forward.1} parent=1 // pred_region
      %95 = dma.done [#allocation5], 1024
    $region89: #{mshmm_forward.1} parent=1 // pred_fallthru
      _
    %v99 = vld [vmem:[%s0] sm:$0xf]
    %v100 = vld [vmem:[%s0 + $0x4] sm:$0xf]
    %v101 = vld [vmem:[%s0 + $0x8] sm:$0xf]
    %v102 = vld [vmem:[%s0 + $0xc] sm:$0xf]
    %v103 = vld [vmem:[%s0 + $0x10] sm:$0xf]
    %v104 = vld [vmem:[%s0 + $0x14] sm:$0xf]
    %v105 = vld [vmem:[%s0 + $0x18] sm:$0xf]
    %v106 = vld [vmem:[%s0 + $0x1c] sm:$0xf]
    %v107 = vld [vmem:[%s0 + $0x20] sm:$0xf]
    %v108 = vld [vmem:[%s0 + $0x24] sm:$0xf]
    %v109 = vld [vmem:[%s0 + $0x28] sm:$0xf]
    %v110 = vld [vmem:[%s0 + $0x2c] sm:$0xf]
    %v111 = vld [vmem:[%s0 + $0x30] sm:$0xf]
    %v112 = vld [vmem:[%s0 + $0x34] sm:$0xf]
    %v113 = vld [vmem:[%s0 + $0x38] sm:$0xf]
    %v114 = vld [vmem:[%s0 + $0x3c] sm:$0xf]
    %v115 = vld [vmem:[%s3] sm:$0xf]
    %v116 = vld [vmem:[%s3 + $0x4] sm:$0xf]
    %v117 = vld [vmem:[%s3 + $0x8] sm:$0xf]
    %v118 = vld [vmem:[%s3 + $0xc] sm:$0xf]
    %v119 = vld [vmem:[%s3 + $0x10] sm:$0xf]
    %v120 = vld [vmem:[%s3 + $0x14] sm:$0xf]
    %v121 = vld [vmem:[%s3 + $0x18] sm:$0xf]
    %v122 = vld [vmem:[%s3 + $0x1c] sm:$0xf]
    %v123 = vld [vmem:[%s3 + $0x20] sm:$0xf]
    %v124 = vld [vmem:[%s3 + $0x24] sm:$0xf]
    %v125 = vld [vmem:[%s3 + $0x28] sm:$0xf]
    %v126 = vld [vmem:[%s3 + $0x2c] sm:$0xf]
    %v127 = vld [vmem:[%s3 + $0x30] sm:$0xf]
    %v128 = vld [vmem:[%s3 + $0x34] sm:$0xf]
    %v129 = vld [vmem:[%s3 + $0x38] sm:$0xf]
    %v130 = vld [vmem:[%s3 + $0x3c] sm:$0xf]
    %v131 = vld [vmem:[%s4] sm:$0x1]
    %v132 = vld [vmem:[%s5] sm:$0xf]
    %v133 = vld [vmem:[%s5 + $0x4] sm:$0xf]
    %v134 = vld [vmem:[%s5 + $0x8] sm:$0xf]
    %v135 = vld [vmem:[%s5 + $0xc] sm:$0xf]
    %v136 = vld [vmem:[%s5 + $0x10] sm:$0xf]
    %v137 = vld [vmem:[%s5 + $0x14] sm:$0xf]
    %v138 = vld [vmem:[%s5 + $0x18] sm:$0xf]
    %v139 = vld [vmem:[%s5 + $0x1c] sm:$0xf]
    %v140 = vld [vmem:[%s5 + $0x20] sm:$0xf]
    %v141 = vld [vmem:[%s5 + $0x24] sm:$0xf]
    %v142 = vld [vmem:[%s5 + $0x28] sm:$0xf]
    %v143 = vld [vmem:[%s5 + $0x2c] sm:$0xf]
    %v144 = vld [vmem:[%s5 + $0x30] sm:$0xf]
    %v145 = vld [vmem:[%s5 + $0x34] sm:$0xf]
    %v146 = vld [vmem:[%s5 + $0x38] sm:$0xf]
    %v147 = vld [vmem:[%s5 + $0x3c] sm:$0xf]
    %v148 = vld [vmem:[%s6] sm:$0x1]
    %v150 = vlaneseq
    %v151 = vshrl.u32 %v150, 7
    %v152 = vsub.s32 0, %v151
    %v153 = vrot.slane %v131, %v152
    %v171 = vunpack.c.l.b16 %v99
    %v172 = vunpack.c.l.b16 %v100
    %v173 = vunpack.c.l.b16 %v101
    %v174 = vunpack.c.l.b16 %v102
    %v175 = vunpack.c.l.b16 %v103
    %v176 = vunpack.c.l.b16 %v104
    %v177 = vunpack.c.l.b16 %v105
    %v178 = vunpack.c.l.b16 %v106
    %v179 = vunpack.c.l.b16 %v107
    %v180 = vunpack.c.l.b16 %v108
    %v181 = vunpack.c.l.b16 %v109
    %v182 = vunpack.c.l.b16 %v110
    %v183 = vunpack.c.l.b16 %v111
    %v184 = vunpack.c.l.b16 %v112
    %v185 = vunpack.c.l.b16 %v113
    %v186 = vunpack.c.l.b16 %v114
    %v187 = vpack.c.b16 %v172, %v171
    %v188 = vpack.c.b16 %v174, %v173
    %v189 = vpack.c.b16 %v176, %v175
    %v190 = vpack.c.b16 %v178, %v177
    %v191 = vpack.c.b16 %v180, %v179
    %v192 = vpack.c.b16 %v182, %v181
    %v193 = vpack.c.b16 %v184, %v183
    %v194 = vpack.c.b16 %v186, %v185
    %v219 = vunpack.c.l.b16 %v115
    %v220 = vunpack.c.l.b16 %v116
    %v221 = vunpack.c.l.b16 %v117
    %v222 = vunpack.c.l.b16 %v118
    %v223 = vunpack.c.l.b16 %v119
    %v224 = vunpack.c.l.b16 %v120
    %v225 = vunpack.c.l.b16 %v121
    %v226 = vunpack.c.l.b16 %v122
    %v227 = vunpack.c.l.b16 %v123
    %v228 = vunpack.c.l.b16 %v124
    %v229 = vunpack.c.l.b16 %v125
    %v230 = vunpack.c.l.b16 %v126
    %v231 = vunpack.c.l.b16 %v127
    %v232 = vunpack.c.l.b16 %v128
    %v233 = vunpack.c.l.b16 %v129
    %v234 = vunpack.c.l.b16 %v130
    %v235 = vpack.c.b16 %v220, %v219
    %v236 = vpack.c.b16 %v222, %v221
    %v237 = vpack.c.b16 %v224, %v223
    %v238 = vpack.c.b16 %v226, %v225
    %v239 = vpack.c.b16 %v228, %v227
    %v240 = vpack.c.b16 %v230, %v229
    %v241 = vpack.c.b16 %v232, %v231
    %v242 = vpack.c.b16 %v234, %v233
    %251 = vmatprep.subr.bf16.mxu0 0
    %252 = vmatpush1.bf16.msra.mxu0 %v235
    %253 = vmatprep.subr.bf16.mxu0 0
    %254 = vmatpush1.bf16.msra.mxu0 %v236
    %255 = vmatprep.subr.bf16.mxu0 0
    %256 = vmatpush1.bf16.msra.mxu0 %v237
    %257 = vmatprep.subr.bf16.mxu0 0
    %258 = vmatpush1.bf16.msra.mxu0 %v238
    %259 = vmatprep.subr.bf16.mxu0 0
    %260 = vmatpush1.bf16.msra.mxu0 %v239
    %261 = vmatprep.subr.bf16.mxu0 0
    %262 = vmatpush1.bf16.msra.mxu0 %v240
    %263 = vmatprep.subr.bf16.mxu0 0
    %264 = vmatpush1.bf16.msra.mxu0 %v241
    %265 = vmatprep.subr.bf16.mxu0 0
    %266 = vmatpush1.bf16.msra.mxu0 %v242
    %267 = vmatprep.subr.bf16.mxu0 0
    %268 = vmatpush1.bf16.msra.mxu0 0
    %269 = vmatprep.subr.bf16.mxu0 0
    %270 = vmatpush1.bf16.msra.mxu0 0
    %271 = vmatprep.subr.bf16.mxu0 0
    %272 = vmatpush1.bf16.msra.mxu0 0
    %273 = vmatprep.subr.bf16.mxu0 0
    %274 = vmatpush1.bf16.msra.mxu0 0
    %275 = vmatprep.subr.bf16.mxu0 0
    %276 = vmatpush1.bf16.msra.mxu0 0
    %277 = vmatprep.subr.bf16.mxu0 0
    %278 = vmatpush1.bf16.msra.mxu0 0
    %279 = vmatprep.subr.bf16.mxu0 0
    %280 = vmatpush1.bf16.msra.mxu0 0
    %281 = vmatprep.subr.bf16.mxu0 0
    %282 = vmatpush1.bf16.msra.mxu0 0
    %283 = vmatprep.mubr.bf16.mxu0 0
    %284 = vmatmul.mubr.bf16.gmra.mrb[0].mxu0 %v187
    %v285 = vpop.f32.mrb[0].mxu0
    %v286 = vadd.f32 %v153, %v285
    %v287 = vpop.f32.mrb[0].mxu0
    %v288 = vpop.f32.mrb[0].mxu0
    %v289 = vadd.f32 %v153, %v288
    %v290 = vpop.f32.mrb[0].mxu0
    %291 = vmatprep.mubr.bf16.mxu0 0
    %292 = vmatmul.mubr.bf16.gmra.mrb[0].mxu0 %v188
    %v293 = vpop.f32.mrb[0].mxu0
    %v294 = vadd.f32 %v153, %v293
    %v295 = vpop.f32.mrb[0].mxu0
    %v296 = vpop.f32.mrb[0].mxu0
    %v297 = vadd.f32 %v153, %v296
    %v298 = vpop.f32.mrb[0].mxu0
    %299 = vmatprep.mubr.bf16.mxu0 0
    %300 = vmatmul.mubr.bf16.gmra.mrb[0].mxu0 %v189
    %v301 = vpop.f32.mrb[0].mxu0
    %v302 = vadd.f32 %v153, %v301
    %v303 = vpop.f32.mrb[0].mxu0
    %v304 = vpop.f32.mrb[0].mxu0
    %v305 = vadd.f32 %v153, %v304
    %v306 = vpop.f32.mrb[0].mxu0
    %307 = vmatprep.mubr.bf16.mxu0 0
    %308 = vmatmul.mubr.bf16.gmra.mrb[0].mxu0 %v190
    %v309 = vpop.f32.mrb[0].mxu0
    %v310 = vadd.f32 %v153, %v309
    %v311 = vpop.f32.mrb[0].mxu0
    %v312 = vpop.f32.mrb[0].mxu0
    %v313 = vadd.f32 %v153, %v312
    %v314 = vpop.f32.mrb[0].mxu0
    %315 = vmatprep.mubr.bf16.mxu0 0
    %316 = vmatmul.mubr.bf16.gmra.mrb[0].mxu0 %v191
    %v317 = vpop.f32.mrb[0].mxu0
    %v318 = vadd.f32 %v153, %v317
    %v319 = vpop.f32.mrb[0].mxu0
    %v320 = vpop.f32.mrb[0].mxu0
    %v321 = vadd.f32 %v153, %v320
    %v322 = vpop.f32.mrb[0].mxu0
    %323 = vmatprep.mubr.bf16.mxu0 0
    %324 = vmatmul.mubr.bf16.gmra.mrb[0].mxu0 %v192
    %v325 = vpop.f32.mrb[0].mxu0
    %v326 = vadd.f32 %v153, %v325
    %v327 = vpop.f32.mrb[0].mxu0
    %v328 = vpop.f32.mrb[0].mxu0
    %v329 = vadd.f32 %v153, %v328
    %v330 = vpop.f32.mrb[0].mxu0
    %331 = vmatprep.mubr.bf16.mxu0 0
    %332 = vmatmul.mubr.bf16.gmra.mrb[0].mxu0 %v193
    %v333 = vpop.f32.mrb[0].mxu0
    %v334 = vadd.f32 %v153, %v333
    %v335 = vpop.f32.mrb[0].mxu0
    %v336 = vpop.f32.mrb[0].mxu0
    %v337 = vadd.f32 %v153, %v336
    %v338 = vpop.f32.mrb[0].mxu0
    %339 = vmatprep.mubr.bf16.mxu0 0
    %340 = vmatmul.mubr.bf16.gmra.mrb[0].mxu0 %v194
    %v341 = vpop.f32.mrb[0].mxu0
    %v342 = vadd.f32 %v153, %v341
    %v343 = vpop.f32.mrb[0].mxu0
    %v344 = vpop.f32.mrb[0].mxu0
    %v345 = vadd.f32 %v153, %v344
    %v346 = vpop.f32.mrb[0].mxu0
    %347 = vdwg.mxu0
    %v348 = vmax.f32 %v286, 0.0
    %v349 = vmax.f32 %v289, 0.0
    %v350 = vmax.f32 %v294, 0.0
    %v351 = vmax.f32 %v297, 0.0
    %v352 = vmax.f32 %v302, 0.0
    %v353 = vmax.f32 %v305, 0.0
    %v354 = vmax.f32 %v310, 0.0
    %v355 = vmax.f32 %v313, 0.0
    %v356 = vmax.f32 %v318, 0.0
    %v357 = vmax.f32 %v321, 0.0
    %v358 = vmax.f32 %v326, 0.0
    %v359 = vmax.f32 %v329, 0.0
    %v360 = vmax.f32 %v334, 0.0
    %v361 = vmax.f32 %v337, 0.0
    %v362 = vmax.f32 %v342, 0.0
    %v363 = vmax.f32 %v345, 0.0
    %v364 = vpack.c.bf16 %v349, %v348
    %v365 = vpack.c.bf16 %v351, %v350
    %v366 = vpack.c.bf16 %v353, %v352
    %v367 = vpack.c.bf16 %v355, %v354
    %v368 = vpack.c.bf16 %v357, %v356
    %v369 = vpack.c.bf16 %v359, %v358
    %v370 = vpack.c.bf16 %v361, %v360
    %v371 = vpack.c.bf16 %v363, %v362
    %v373 = vlaneseq
    %v374 = vshrl.u32 %v373, 7
    %v375 = vsub.s32 0, %v374
    %v376 = vrot.slane %v148, %v375
    %v394 = vunpack.c.l.b16 %v132
    %v395 = vunpack.c.l.b16 %v133
    %v396 = vunpack.c.l.b16 %v134
    %v397 = vunpack.c.l.b16 %v135
    %v398 = vunpack.c.l.b16 %v136
    %v399 = vunpack.c.l.b16 %v137
    %v400 = vunpack.c.l.b16 %v138
    %v401 = vunpack.c.l.b16 %v139
    %v402 = vunpack.c.l.b16 %v140
    %v403 = vunpack.c.l.b16 %v141
    %v404 = vunpack.c.l.b16 %v142
    %v405 = vunpack.c.l.b16 %v143
    %v406 = vunpack.c.l.b16 %v144
    %v407 = vunpack.c.l.b16 %v145
    %v408 = vunpack.c.l.b16 %v146
    %v409 = vunpack.c.l.b16 %v147
    %v410 = vpack.c.b16 %v395, %v394
    %v411 = vpack.c.b16 %v397, %v396
    %v412 = vpack.c.b16 %v399, %v398
    %v413 = vpack.c.b16 %v401, %v400
    %v414 = vpack.c.b16 %v403, %v402
    %v415 = vpack.c.b16 %v405, %v404
    %v416 = vpack.c.b16 %v407, %v406
    %v417 = vpack.c.b16 %v409, %v408
    %426 = vmatprep.subr.bf16.mxu0 0
    %427 = vmatpush1.bf16.msra.mxu0 %v410
    %428 = vmatprep.subr.bf16.mxu0 0
    %429 = vmatpush1.bf16.msra.mxu0 %v411
    %430 = vmatprep.subr.bf16.mxu0 0
    %431 = vmatpush1.bf16.msra.mxu0 %v412
    %432 = vmatprep.subr.bf16.mxu0 0
    %433 = vmatpush1.bf16.msra.mxu0 %v413
    %434 = vmatprep.subr.bf16.mxu0 0
    %435 = vmatpush1.bf16.msra.mxu0 %v414
    %436 = vmatprep.subr.bf16.mxu0 0
    %437 = vmatpush1.bf16.msra.mxu0 %v415
    %438 = vmatprep.subr.bf16.mxu0 0
    %439 = vmatpush1.bf16.msra.mxu0 %v416
    %440 = vmatprep.subr.bf16.mxu0 0
    %441 = vmatpush1.bf16.msra.mxu0 %v417
    %442 = vmatprep.subr.bf16.mxu0 0
    %443 = vmatpush1.bf16.msra.mxu0 0
    %444 = vmatprep.subr.bf16.mxu0 0
    %445 = vmatpush1.bf16.msra.mxu0 0
    %446 = vmatprep.subr.bf16.mxu0 0
    %447 = vmatpush1.bf16.msra.mxu0 0
    %448 = vmatprep.subr.bf16.mxu0 0
    %449 = vmatpush1.bf16.msra.mxu0 0
    %450 = vmatprep.subr.bf16.mxu0 0
    %451 = vmatpush1.bf16.msra.mxu0 0
    %452 = vmatprep.subr.bf16.mxu0 0
    %453 = vmatpush1.bf16.msra.mxu0 0
    %454 = vmatprep.subr.bf16.mxu0 0
    %455 = vmatpush1.bf16.msra.mxu0 0
    %456 = vmatprep.subr.bf16.mxu0 0
    %457 = vmatpush1.bf16.msra.mxu0 0
    %458 = vmatprep.mubr.bf16.mxu0 0
    %459 = vmatmul.mubr.bf16.gmra.mrb[0].mxu0 %v364
    %v460 = vpop.f32.mrb[0].mxu0
    %v461 = vadd.f32 %v376, %v460
    %v462 = vpop.f32.mrb[0].mxu0
    %v463 = vpop.f32.mrb[0].mxu0
    %v464 = vadd.f32 %v376, %v463
    %v465 = vpop.f32.mrb[0].mxu0
    %466 = vmatprep.mubr.bf16.mxu0 0
    %467 = vmatmul.mubr.bf16.gmra.mrb[0].mxu0 %v365
    %v468 = vpop.f32.mrb[0].mxu0
    %v469 = vadd.f32 %v376, %v468
    %v470 = vpop.f32.mrb[0].mxu0
    %v471 = vpop.f32.mrb[0].mxu0
    %v472 = vadd.f32 %v376, %v471
    %v473 = vpop.f32.mrb[0].mxu0
    %474 = vmatprep.mubr.bf16.mxu0 0
    %475 = vmatmul.mubr.bf16.gmra.mrb[0].mxu0 %v366
    %v476 = vpop.f32.mrb[0].mxu0
    %v477 = vadd.f32 %v376, %v476
    %v478 = vpop.f32.mrb[0].mxu0
    %v479 = vpop.f32.mrb[0].mxu0
    %v480 = vadd.f32 %v376, %v479
    %v481 = vpop.f32.mrb[0].mxu0
    %482 = vmatprep.mubr.bf16.mxu0 0
    %483 = vmatmul.mubr.bf16.gmra.mrb[0].mxu0 %v367
    %v484 = vpop.f32.mrb[0].mxu0
    %v485 = vadd.f32 %v376, %v484
    %v486 = vpop.f32.mrb[0].mxu0
    %v487 = vpop.f32.mrb[0].mxu0
    %v488 = vadd.f32 %v376, %v487
    %v489 = vpop.f32.mrb[0].mxu0
    %490 = vmatprep.mubr.bf16.mxu0 0
    %491 = vmatmul.mubr.bf16.gmra.mrb[0].mxu0 %v368
    %v492 = vpop.f32.mrb[0].mxu0
    %v493 = vadd.f32 %v376, %v492
    %v494 = vpop.f32.mrb[0].mxu0
    %v495 = vpop.f32.mrb[0].mxu0
    %v496 = vadd.f32 %v376, %v495
    %v497 = vpop.f32.mrb[0].mxu0
    %498 = vmatprep.mubr.bf16.mxu0 0
    %499 = vmatmul.mubr.bf16.gmra.mrb[0].mxu0 %v369
    %v500 = vpop.f32.mrb[0].mxu0
    %v501 = vadd.f32 %v376, %v500
    %v502 = vpop.f32.mrb[0].mxu0
    %v503 = vpop.f32.mrb[0].mxu0
    %v504 = vadd.f32 %v376, %v503
    %v505 = vpop.f32.mrb[0].mxu0
    %506 = vmatprep.mubr.bf16.mxu0 0
    %507 = vmatmul.mubr.bf16.gmra.mrb[0].mxu0 %v370
    %v508 = vpop.f32.mrb[0].mxu0
    %v509 = vadd.f32 %v376, %v508
    %v510 = vpop.f32.mrb[0].mxu0
    %v511 = vpop.f32.mrb[0].mxu0
    %v512 = vadd.f32 %v376, %v511
    %v513 = vpop.f32.mrb[0].mxu0
    %514 = vmatprep.mubr.bf16.mxu0 0
    %515 = vmatmul.mubr.bf16.gmra.mrb[0].mxu0 %v371
    %v516 = vpop.f32.mrb[0].mxu0
    %v517 = vadd.f32 %v376, %v516
    %v518 = vpop.f32.mrb[0].mxu0
    %v519 = vpop.f32.mrb[0].mxu0
    %v520 = vadd.f32 %v376, %v519
    %v521 = vpop.f32.mrb[0].mxu0
    %522 = vdwg.mxu0
    %v523 = vmax.f32 %v461, 0.0
    %v524 = vmax.f32 %v464, 0.0
    %v525 = vmax.f32 %v469, 0.0
    %v526 = vmax.f32 %v472, 0.0
    %v527 = vmax.f32 %v477, 0.0
    %v528 = vmax.f32 %v480, 0.0
    %v529 = vmax.f32 %v485, 0.0
    %v530 = vmax.f32 %v488, 0.0
    %v531 = vmax.f32 %v493, 0.0
    %v532 = vmax.f32 %v496, 0.0
    %v533 = vmax.f32 %v501, 0.0
    %v534 = vmax.f32 %v504, 0.0
    %v535 = vmax.f32 %v509, 0.0
    %v536 = vmax.f32 %v512, 0.0
    %v537 = vmax.f32 %v517, 0.0
    %v538 = vmax.f32 %v520, 0.0
    %v539 = vunpack.c.l.bf16 %v99
    %v540 = vunpack.c.l.bf16 %v100
    %v541 = vunpack.c.l.bf16 %v101
    %v542 = vunpack.c.l.bf16 %v102
    %v543 = vunpack.c.l.bf16 %v103
    %v544 = vunpack.c.l.bf16 %v104
    %v545 = vunpack.c.l.bf16 %v105
    %v546 = vunpack.c.l.bf16 %v106
    %v547 = vunpack.c.l.bf16 %v107
    %v548 = vunpack.c.l.bf16 %v108
    %v549 = vunpack.c.l.bf16 %v109
    %v550 = vunpack.c.l.bf16 %v110
    %v551 = vunpack.c.l.bf16 %v111
    %v552 = vunpack.c.l.bf16 %v112
    %v553 = vunpack.c.l.bf16 %v113
    %v554 = vunpack.c.l.bf16 %v114
    %v555 = vadd.f32 %v523, %v539
    %v556 = vadd.f32 %v524, %v540
    %v557 = vadd.f32 %v525, %v541
    %v558 = vadd.f32 %v526, %v542
    %v559 = vadd.f32 %v527, %v543
    %v560 = vadd.f32 %v528, %v544
    %v561 = vadd.f32 %v529, %v545
    %v562 = vadd.f32 %v530, %v546
    %v563 = vadd.f32 %v531, %v547
    %v564 = vadd.f32 %v532, %v548
    %v565 = vadd.f32 %v533, %v549
    %v566 = vadd.f32 %v534, %v550
    %v567 = vadd.f32 %v535, %v551
    %v568 = vadd.f32 %v536, %v552
    %v569 = vadd.f32 %v537, %v553
    %v570 = vadd.f32 %v538, %v554
    %v571 = vpack.c.bf16 %v556, %v555
    %v572 = vpack.c.bf16 %v558, %v557
    %v573 = vpack.c.bf16 %v560, %v559
    %v574 = vpack.c.bf16 %v562, %v561
    %v575 = vpack.c.bf16 %v564, %v563
    %v576 = vpack.c.bf16 %v566, %v565
    %v577 = vpack.c.bf16 %v568, %v567
    %v578 = vpack.c.bf16 %v570, %v569
    %v579 = vld [vmem:[%s7] sm:$0xf]
    %v580 = vld [vmem:[%s7 + $0x4] sm:$0xf]
    %v581 = vld [vmem:[%s7 + $0x8] sm:$0xf]
    %v582 = vld [vmem:[%s7 + $0xc] sm:$0xf]
    %v583 = vld [vmem:[%s7 + $0x10] sm:$0xf]
    %v584 = vld [vmem:[%s7 + $0x14] sm:$0xf]
    %v585 = vld [vmem:[%s7 + $0x18] sm:$0xf]
    %v586 = vld [vmem:[%s7 + $0x1c] sm:$0xf]
    %v587 = vld [vmem:[%s7 + $0x20] sm:$0xf]
    %v588 = vld [vmem:[%s7 + $0x24] sm:$0xf]
    %v589 = vld [vmem:[%s7 + $0x28] sm:$0xf]
    %v590 = vld [vmem:[%s7 + $0x2c] sm:$0xf]
    %v591 = vld [vmem:[%s7 + $0x30] sm:$0xf]
    %v592 = vld [vmem:[%s7 + $0x34] sm:$0xf]
    %v593 = vld [vmem:[%s7 + $0x38] sm:$0xf]
    %v594 = vld [vmem:[%s7 + $0x3c] sm:$0xf]
    %v611 = vunpack.c.l.b16 %v579
    %v612 = vunpack.c.l.b16 %v580
    %v613 = vunpack.c.l.b16 %v581
    %v614 = vunpack.c.l.b16 %v582
    %v615 = vunpack.c.l.b16 %v583
    %v616 = vunpack.c.l.b16 %v584
    %v617 = vunpack.c.l.b16 %v585
    %v618 = vunpack.c.l.b16 %v586
    %v619 = vunpack.c.l.b16 %v587
    %v620 = vunpack.c.l.b16 %v588
    %v621 = vunpack.c.l.b16 %v589
    %v622 = vunpack.c.l.b16 %v590
    %v623 = vunpack.c.l.b16 %v591
    %v624 = vunpack.c.l.b16 %v592
    %v625 = vunpack.c.l.b16 %v593
    %v626 = vunpack.c.l.b16 %v594
    %v627 = vpack.c.b16 %v612, %v611
    %v628 = vpack.c.b16 %v614, %v613
    %v629 = vpack.c.b16 %v616, %v615
    %v630 = vpack.c.b16 %v618, %v617
    %v631 = vpack.c.b16 %v620, %v619
    %v632 = vpack.c.b16 %v622, %v621
    %v633 = vpack.c.b16 %v624, %v623
    %v634 = vpack.c.b16 %v626, %v625
    %643 = vmatprep.subr.bf16.mxu0 0
    %644 = vmatpush1.bf16.msra.mxu0 %v627
    %645 = vmatprep.subr.bf16.mxu0 0
    %646 = vmatpush1.bf16.msra.mxu0 %v628
    %647 = vmatprep.subr.bf16.mxu0 0
    %648 = vmatpush1.bf16.msra.mxu0 %v629
    %649 = vmatprep.subr.bf16.mxu0 0
    %650 = vmatpush1.bf16.msra.mxu0 %v630
    %651 = vmatprep.subr.bf16.mxu0 0
    %652 = vmatpush1.bf16.msra.mxu0 %v631
    %653 = vmatprep.subr.bf16.mxu0 0
    %654 = vmatpush1.bf16.msra.mxu0 %v632
    %655 = vmatprep.subr.bf16.mxu0 0
    %656 = vmatpush1.bf16.msra.mxu0 %v633
    %657 = vmatprep.subr.bf16.mxu0 0
    %658 = vmatpush1.bf16.msra.mxu0 %v634
    %659 = vmatprep.subr.bf16.mxu0 0
    %660 = vmatpush1.bf16.msra.mxu0 0
    %661 = vmatprep.subr.bf16.mxu0 0
    %662 = vmatpush1.bf16.msra.mxu0 0
    %663 = vmatprep.subr.bf16.mxu0 0
    %664 = vmatpush1.bf16.msra.mxu0 0
    %665 = vmatprep.subr.bf16.mxu0 0
    %666 = vmatpush1.bf16.msra.mxu0 0
    %667 = vmatprep.subr.bf16.mxu0 0
    %668 = vmatpush1.bf16.msra.mxu0 0
    %669 = vmatprep.subr.bf16.mxu0 0
    %670 = vmatpush1.bf16.msra.mxu0 0
    %671 = vmatprep.subr.bf16.mxu0 0
    %672 = vmatpush1.bf16.msra.mxu0 0
    %673 = vmatprep.subr.bf16.mxu0 0
    %674 = vmatpush1.bf16.msra.mxu0 0
    %675 = vmatprep.mubr.bf16.mxu0 0
    %676 = vmatmul.mubr.bf16.gmra.mrb[0].mxu0 %v571
    %v677 = vpop.f32.mrb[0].mxu0
    %v678 = vadd.f32 0.0, %v677
    %v679 = vpop.f32.mrb[0].mxu0
    %v680 = vpop.f32.mrb[0].mxu0
    %v681 = vadd.f32 0.0, %v680
    %v682 = vpop.f32.mrb[0].mxu0
    %683 = vmatprep.mubr.bf16.mxu0 0
    %684 = vmatmul.mubr.bf16.gmra.mrb[0].mxu0 %v572
    %v685 = vpop.f32.mrb[0].mxu0
    %v686 = vadd.f32 0.0, %v685
    %v687 = vpop.f32.mrb[0].mxu0
    %v688 = vpop.f32.mrb[0].mxu0
    %v689 = vadd.f32 0.0, %v688
    %v690 = vpop.f32.mrb[0].mxu0
    %691 = vmatprep.mubr.bf16.mxu0 0
    %692 = vmatmul.mubr.bf16.gmra.mrb[0].mxu0 %v573
    %v693 = vpop.f32.mrb[0].mxu0
    %v694 = vadd.f32 0.0, %v693
    %v695 = vpop.f32.mrb[0].mxu0
    %v696 = vpop.f32.mrb[0].mxu0
    %v697 = vadd.f32 0.0, %v696
    %v698 = vpop.f32.mrb[0].mxu0
    %699 = vmatprep.mubr.bf16.mxu0 0
    %700 = vmatmul.mubr.bf16.gmra.mrb[0].mxu0 %v574
    %v701 = vpop.f32.mrb[0].mxu0
    %v702 = vadd.f32 0.0, %v701
    %v703 = vpop.f32.mrb[0].mxu0
    %v704 = vpop.f32.mrb[0].mxu0
    %v705 = vadd.f32 0.0, %v704
    %v706 = vpop.f32.mrb[0].mxu0
    %707 = vmatprep.mubr.bf16.mxu0 0
    %708 = vmatmul.mubr.bf16.gmra.mrb[0].mxu0 %v575
    %v709 = vpop.f32.mrb[0].mxu0
    %v710 = vadd.f32 0.0, %v709
    %v711 = vpop.f32.mrb[0].mxu0
    %v712 = vpop.f32.mrb[0].mxu0
    %v713 = vadd.f32 0.0, %v712
    %v714 = vpop.f32.mrb[0].mxu0
    %715 = vmatprep.mubr.bf16.mxu0 0
    %716 = vmatmul.mubr.bf16.gmra.mrb[0].mxu0 %v576
    %v717 = vpop.f32.mrb[0].mxu0
    %v718 = vadd.f32 0.0, %v717
    %v719 = vpop.f32.mrb[0].mxu0
    %v720 = vpop.f32.mrb[0].mxu0
    %v721 = vadd.f32 0.0, %v720
    %v722 = vpop.f32.mrb[0].mxu0
    %723 = vmatprep.mubr.bf16.mxu0 0
    %724 = vmatmul.mubr.bf16.gmra.mrb[0].mxu0 %v577
    %v725 = vpop.f32.mrb[0].mxu0
    %v726 = vadd.f32 0.0, %v725
    %v727 = vpop.f32.mrb[0].mxu0
    %v728 = vpop.f32.mrb[0].mxu0
    %v729 = vadd.f32 0.0, %v728
    %v730 = vpop.f32.mrb[0].mxu0
    %731 = vmatprep.mubr.bf16.mxu0 0
    %732 = vmatmul.mubr.bf16.gmra.mrb[0].mxu0 %v578
    %v733 = vpop.f32.mrb[0].mxu0
    %v734 = vadd.f32 0.0, %v733
    %v735 = vpop.f32.mrb[0].mxu0
    %v736 = vpop.f32.mrb[0].mxu0
    %v737 = vadd.f32 0.0, %v736
    %v738 = vpop.f32.mrb[0].mxu0
    %739 = vdwg.mxu0
    %740 = vmax.xlane.f32.xlu0 %v678
    %v741 = vpop.xlane.xlu0 %740
    %742 = vmax.xlane.f32.xlu0 %v681
    %v743 = vpop.xlane.xlu0 %742
    %744 = vmax.xlane.f32.xlu0 %v686
    %v745 = vpop.xlane.xlu0 %744
    %746 = vmax.xlane.f32.xlu0 %v689
    %v747 = vpop.xlane.xlu0 %746
    %748 = vmax.xlane.f32.xlu0 %v694
    %v749 = vpop.xlane.xlu0 %748
    %750 = vmax.xlane.f32.xlu0 %v697
    %v751 = vpop.xlane.xlu0 %750
    %752 = vmax.xlane.f32.xlu0 %v702
    %v753 = vpop.xlane.xlu0 %752
    %754 = vmax.xlane.f32.xlu0 %v705
    %v755 = vpop.xlane.xlu0 %754
    %756 = vmax.xlane.f32.xlu0 %v710
    %v757 = vpop.xlane.xlu0 %756
    %758 = vmax.xlane.f32.xlu0 %v713
    %v759 = vpop.xlane.xlu0 %758
    %760 = vmax.xlane.f32.xlu0 %v718
    %v761 = vpop.xlane.xlu0 %760
    %762 = vmax.xlane.f32.xlu0 %v721
    %v763 = vpop.xlane.xlu0 %762
    %764 = vmax.xlane.f32.xlu0 %v726
    %v765 = vpop.xlane.xlu0 %764
    %766 = vmax.xlane.f32.xlu0 %v729
    %v767 = vpop.xlane.xlu0 %766
    %768 = vmax.xlane.f32.xlu0 %v734
    %v769 = vpop.xlane.xlu0 %768
    %770 = vmax.xlane.f32.xlu0 %v737
    %v771 = vpop.xlane.xlu0 %770
    %v772 = vsub.f32 %v678, %v741
    %v773 = vsub.f32 %v681, %v743
    %v774 = vsub.f32 %v686, %v745
    %v775 = vsub.f32 %v689, %v747
    %v776 = vsub.f32 %v694, %v749
    %v777 = vsub.f32 %v697, %v751
    %v778 = vsub.f32 %v702, %v753
    %v779 = vsub.f32 %v705, %v755
    %v780 = vsub.f32 %v710, %v757
    %v781 = vsub.f32 %v713, %v759
    %v782 = vsub.f32 %v718, %v761
    %v783 = vsub.f32 %v721, %v763
    %v784 = vsub.f32 %v726, %v765
    %v785 = vsub.f32 %v729, %v767
    %v786 = vsub.f32 %v734, %v769
    %v787 = vsub.f32 %v737, %v771
    %v788 = vmul.f32 %v772, 1.442695
    %v789 = vpow.pop %v788
    %v790 = vmul.f32 %v773, 1.442695
    %v791 = vpow.pop %v790
    %v792 = vmul.f32 %v774, 1.442695
    %v793 = vpow.pop %v792
    %v794 = vmul.f32 %v775, 1.442695
    %v795 = vpow.pop %v794
    %v796 = vmul.f32 %v776, 1.442695
    %v797 = vpow.pop %v796
    %v798 = vmul.f32 %v777, 1.442695
    %v799 = vpow.pop %v798
    %v800 = vmul.f32 %v778, 1.442695
    %v801 = vpow.pop %v800
    %v802 = vmul.f32 %v779, 1.442695
    %v803 = vpow.pop %v802
    %v804 = vmul.f32 %v780, 1.442695
    %v805 = vpow.pop %v804
    %v806 = vmul.f32 %v781, 1.442695
    %v807 = vpow.pop %v806
    %v808 = vmul.f32 %v782, 1.442695
    %v809 = vpow.pop %v808
    %v810 = vmul.f32 %v783, 1.442695
    %v811 = vpow.pop %v810
    %v812 = vmul.f32 %v784, 1.442695
    %v813 = vpow.pop %v812
    %v814 = vmul.f32 %v785, 1.442695
    %v815 = vpow.pop %v814
    %v816 = vmul.f32 %v786, 1.442695
    %v817 = vpow.pop %v816
    %v818 = vmul.f32 %v787, 1.442695
    %v819 = vpow.pop %v818
    %820 = vadd.xlane.f32.xlu0 %v789
    %v821 = vpop.xlane.xlu0 %820
    %822 = vadd.xlane.f32.xlu0 %v791
    %v823 = vpop.xlane.xlu0 %822
    %824 = vadd.xlane.f32.xlu0 %v793
    %v825 = vpop.xlane.xlu0 %824
    %826 = vadd.xlane.f32.xlu0 %v795
    %v827 = vpop.xlane.xlu0 %826
    %828 = vadd.xlane.f32.xlu0 %v797
    %v829 = vpop.xlane.xlu0 %828
    %830 = vadd.xlane.f32.xlu0 %v799
    %v831 = vpop.xlane.xlu0 %830
    %832 = vadd.xlane.f32.xlu0 %v801
    %v833 = vpop.xlane.xlu0 %832
    %834 = vadd.xlane.f32.xlu0 %v803
    %v835 = vpop.xlane.xlu0 %834
    %836 = vadd.xlane.f32.xlu0 %v805
    %v837 = vpop.xlane.xlu0 %836
    %838 = vadd.xlane.f32.xlu0 %v807
    %v839 = vpop.xlane.xlu0 %838
    %840 = vadd.xlane.f32.xlu0 %v809
    %v841 = vpop.xlane.xlu0 %840
    %842 = vadd.xlane.f32.xlu0 %v811
    %v843 = vpop.xlane.xlu0 %842
    %844 = vadd.xlane.f32.xlu0 %v813
    %v845 = vpop.xlane.xlu0 %844
    %846 = vadd.xlane.f32.xlu0 %v815
    %v847 = vpop.xlane.xlu0 %846
    %848 = vadd.xlane.f32.xlu0 %v817
    %v849 = vpop.xlane.xlu0 %848
    %850 = vadd.xlane.f32.xlu0 %v819
    %v851 = vpop.xlane.xlu0 %850
    %v852 = vlog2.pop %v821
    %v853 = vmul.f32 %v852, 0.6931472
    %v854 = vlog2.pop %v823
    %v855 = vmul.f32 %v854, 0.6931472
    %v856 = vlog2.pop %v825
    %v857 = vmul.f32 %v856, 0.6931472
    %v858 = vlog2.pop %v827
    %v859 = vmul.f32 %v858, 0.6931472
    %v860 = vlog2.pop %v829
    %v861 = vmul.f32 %v860, 0.6931472
    %v862 = vlog2.pop %v831
    %v863 = vmul.f32 %v862, 0.6931472
    %v864 = vlog2.pop %v833
    %v865 = vmul.f32 %v864, 0.6931472
    %v866 = vlog2.pop %v835
    %v867 = vmul.f32 %v866, 0.6931472
    %v868 = vlog2.pop %v837
    %v869 = vmul.f32 %v868, 0.6931472
    %v870 = vlog2.pop %v839
    %v871 = vmul.f32 %v870, 0.6931472
    %v872 = vlog2.pop %v841
    %v873 = vmul.f32 %v872, 0.6931472
    %v874 = vlog2.pop %v843
    %v875 = vmul.f32 %v874, 0.6931472
    %v876 = vlog2.pop %v845
    %v877 = vmul.f32 %v876, 0.6931472
    %v878 = vlog2.pop %v847
    %v879 = vmul.f32 %v878, 0.6931472
    %v880 = vlog2.pop %v849
    %v881 = vmul.f32 %v880, 0.6931472
    %v882 = vlog2.pop %v851
    %v883 = vmul.f32 %v882, 0.6931472
    %v884 = vadd.f32 %v741, %v853
    %v885 = vadd.f32 %v743, %v855
    %v886 = vadd.f32 %v745, %v857
    %v887 = vadd.f32 %v747, %v859
    %v888 = vadd.f32 %v749, %v861
    %v889 = vadd.f32 %v751, %v863
    %v890 = vadd.f32 %v753, %v865
    %v891 = vadd.f32 %v755, %v867
    %v892 = vadd.f32 %v757, %v869
    %v893 = vadd.f32 %v759, %v871
    %v894 = vadd.f32 %v761, %v873
    %v895 = vadd.f32 %v763, %v875
    %v896 = vadd.f32 %v765, %v877
    %v897 = vadd.f32 %v767, %v879
    %v898 = vadd.f32 %v769, %v881
    %v899 = vadd.f32 %v771, %v883
    %v900 = vsub.f32 %v678, %v884
    %v901 = vsub.f32 %v681, %v885
    %v902 = vsub.f32 %v686, %v886
    %v903 = vsub.f32 %v689, %v887
    %v904 = vsub.f32 %v694, %v888
    %v905 = vsub.f32 %v697, %v889
    %v906 = vsub.f32 %v702, %v890
    %v907 = vsub.f32 %v705, %v891
    %v908 = vsub.f32 %v710, %v892
    %v909 = vsub.f32 %v713, %v893
    %v910 = vsub.f32 %v718, %v894
    %v911 = vsub.f32 %v721, %v895
    %v912 = vsub.f32 %v726, %v896
    %v913 = vsub.f32 %v729, %v897
    %v914 = vsub.f32 %v734, %v898
    %v915 = vsub.f32 %v737, %v899
    %916 = vst [vmem:[%s20] sm:$0xff] %v900
    %917 = vst [vmem:[%s20 + $0x8] sm:$0xff] %v901
    %918 = vst [vmem:[%s20 + $0x10] sm:$0xff] %v902
    %919 = vst [vmem:[%s20 + $0x18] sm:$0xff] %v903
    %920 = vst [vmem:[%s20 + $0x20] sm:$0xff] %v904
    %921 = vst [vmem:[%s20 + $0x28] sm:$0xff] %v905
    %922 = vst [vmem:[%s20 + $0x30] sm:$0xff] %v906
    %923 = vst [vmem:[%s20 + $0x38] sm:$0xff] %v907
    %924 = vst [vmem:[%s20 + $0x40] sm:$0xff] %v908
    %925 = vst [vmem:[%s20 + $0x48] sm:$0xff] %v909
    %926 = vst [vmem:[%s20 + $0x50] sm:$0xff] %v910
    %927 = vst [vmem:[%s20 + $0x58] sm:$0xff] %v911
    %928 = vst [vmem:[%s20 + $0x60] sm:$0xff] %v912
    %929 = vst [vmem:[%s20 + $0x68] sm:$0xff] %v913
    %930 = vst [vmem:[%s20 + $0x70] sm:$0xff] %v914
    %931 = vst [vmem:[%s20 + $0x78] sm:$0xff] %v915
    %v932 = vld [vmem:[%s1] sm:$0xf]
    %v933 = vld [vmem:[%s1 + $0x4] sm:$0xf]
    %v934 = vld [vmem:[%s1 + $0x8] sm:$0xf]
    %v935 = vld [vmem:[%s1 + $0xc] sm:$0xf]
    %v936 = vld [vmem:[%s1 + $0x10] sm:$0xf]
    %v937 = vld [vmem:[%s1 + $0x14] sm:$0xf]
    %v938 = vld [vmem:[%s1 + $0x18] sm:$0xf]
    %v939 = vld [vmem:[%s1 + $0x1c] sm:$0xf]
    %v940 = vld [vmem:[%s1 + $0x20] sm:$0xf]
    %v941 = vld [vmem:[%s1 + $0x24] sm:$0xf]
    %v942 = vld [vmem:[%s1 + $0x28] sm:$0xf]
    %v943 = vld [vmem:[%s1 + $0x2c] sm:$0xf]
    %v944 = vld [vmem:[%s1 + $0x30] sm:$0xf]
    %v945 = vld [vmem:[%s1 + $0x34] sm:$0xf]
    %v946 = vld [vmem:[%s1 + $0x38] sm:$0xf]
    %v947 = vld [vmem:[%s1 + $0x3c] sm:$0xf]
    %v948 = vld [vmem:[%s8] sm:$0xf]
    %v949 = vld [vmem:[%s8 + $0x4] sm:$0xf]
    %v950 = vld [vmem:[%s8 + $0x8] sm:$0xf]
    %v951 = vld [vmem:[%s8 + $0xc] sm:$0xf]
    %v952 = vld [vmem:[%s8 + $0x10] sm:$0xf]
    %v953 = vld [vmem:[%s8 + $0x14] sm:$0xf]
    %v954 = vld [vmem:[%s8 + $0x18] sm:$0xf]
    %v955 = vld [vmem:[%s8 + $0x1c] sm:$0xf]
    %v956 = vld [vmem:[%s8 + $0x20] sm:$0xf]
    %v957 = vld [vmem:[%s8 + $0x24] sm:$0xf]
    %v958 = vld [vmem:[%s8 + $0x28] sm:$0xf]
    %v959 = vld [vmem:[%s8 + $0x2c] sm:$0xf]
    %v960 = vld [vmem:[%s8 + $0x30] sm:$0xf]
    %v961 = vld [vmem:[%s8 + $0x34] sm:$0xf]
    %v962 = vld [vmem:[%s8 + $0x38] sm:$0xf]
    %v963 = vld [vmem:[%s8 + $0x3c] sm:$0xf]
    %v964 = vld [vmem:[%s9] sm:$0x1]
    %v965 = vld [vmem:[%s10] sm:$0xf]
    %v966 = vld [vmem:[%s10 + $0x4] sm:$0xf]
    %v967 = vld [vmem:[%s10 + $0x8] sm:$0xf]
    %v968 = vld [vmem:[%s10 + $0xc] sm:$0xf]
    %v969 = vld [vmem:[%s10 + $0x10] sm:$0xf]
    %v970 = vld [vmem:[%s10 + $0x14] sm:$0xf]
    %v971 = vld [vmem:[%s10 + $0x18] sm:$0xf]
    %v972 = vld [vmem:[%s10 + $0x1c] sm:$0xf]
    %v973 = vld [vmem:[%s10 + $0x20] sm:$0xf]
    %v974 = vld [vmem:[%s10 + $0x24] sm:$0xf]
    %v975 = vld [vmem:[%s10 + $0x28] sm:$0xf]
    %v976 = vld [vmem:[%s10 + $0x2c] sm:$0xf]
    %v977 = vld [vmem:[%s10 + $0x30] sm:$0xf]
    %v978 = vld [vmem:[%s10 + $0x34] sm:$0xf]
    %v979 = vld [vmem:[%s10 + $0x38] sm:$0xf]
    %v980 = vld [vmem:[%s10 + $0x3c] sm:$0xf]
    %v981 = vld [vmem:[%s11] sm:$0x1]
    %v983 = vlaneseq
    %v984 = vshrl.u32 %v983, 7
    %v985 = vsub.s32 0, %v984
    %v986 = vrot.slane %v964, %v985
    %v1004 = vunpack.c.l.b16 %v932
    %v1005 = vunpack.c.l.b16 %v933
    %v1006 = vunpack.c.l.b16 %v934
    %v1007 = vunpack.c.l.b16 %v935
    %v1008 = vunpack.c.l.b16 %v936
    %v1009 = vunpack.c.l.b16 %v937
    %v1010 = vunpack.c.l.b16 %v938
    %v1011 = vunpack.c.l.b16 %v939
    %v1012 = vunpack.c.l.b16 %v940
    %v1013 = vunpack.c.l.b16 %v941
    %v1014 = vunpack.c.l.b16 %v942
    %v1015 = vunpack.c.l.b16 %v943
    %v1016 = vunpack.c.l.b16 %v944
    %v1017 = vunpack.c.l.b16 %v945
    %v1018 = vunpack.c.l.b16 %v946
    %v1019 = vunpack.c.l.b16 %v947
    %v1020 = vpack.c.b16 %v1005, %v1004
    %v1021 = vpack.c.b16 %v1007, %v1006
    %v1022 = vpack.c.b16 %v1009, %v1008
    %v1023 = vpack.c.b16 %v1011, %v1010
    %v1024 = vpack.c.b16 %v1013, %v1012
    %v1025 = vpack.c.b16 %v1015, %v1014
    %v1026 = vpack.c.b16 %v1017, %v1016
    %v1027 = vpack.c.b16 %v1019, %v1018
    %v1052 = vunpack.c.l.b16 %v948
    %v1053 = vunpack.c.l.b16 %v949
    %v1054 = vunpack.c.l.b16 %v950
    %v1055 = vunpack.c.l.b16 %v951
    %v1056 = vunpack.c.l.b16 %v952
    %v1057 = vunpack.c.l.b16 %v953
    %v1058 = vunpack.c.l.b16 %v954
    %v1059 = vunpack.c.l.b16 %v955
    %v1060 = vunpack.c.l.b16 %v956
    %v1061 = vunpack.c.l.b16 %v957
    %v1062 = vunpack.c.l.b16 %v958
    %v1063 = vunpack.c.l.b16 %v959
    %v1064 = vunpack.c.l.b16 %v960
    %v1065 = vunpack.c.l.b16 %v961
    %v1066 = vunpack.c.l.b16 %v962
    %v1067 = vunpack.c.l.b16 %v963
    %v1068 = vpack.c.b16 %v1053, %v1052
    %v1069 = vpack.c.b16 %v1055, %v1054
    %v1070 = vpack.c.b16 %v1057, %v1056
    %v1071 = vpack.c.b16 %v1059, %v1058
    %v1072 = vpack.c.b16 %v1061, %v1060
    %v1073 = vpack.c.b16 %v1063, %v1062
    %v1074 = vpack.c.b16 %v1065, %v1064
    %v1075 = vpack.c.b16 %v1067, %v1066
    %1084 = vmatprep.subr.bf16.mxu0 0
    %1085 = vmatpush1.bf16.msra.mxu0 %v1068
    %1086 = vmatprep.subr.bf16.mxu0 0
    %1087 = vmatpush1.bf16.msra.mxu0 %v1069
    %1088 = vmatprep.subr.bf16.mxu0 0
    %1089 = vmatpush1.bf16.msra.mxu0 %v1070
    %1090 = vmatprep.subr.bf16.mxu0 0
    %1091 = vmatpush1.bf16.msra.mxu0 %v1071
    %1092 = vmatprep.subr.bf16.mxu0 0
    %1093 = vmatpush1.bf16.msra.mxu0 %v1072
    %1094 = vmatprep.subr.bf16.mxu0 0
    %1095 = vmatpush1.bf16.msra.mxu0 %v1073
    %1096 = vmatprep.subr.bf16.mxu0 0
    %1097 = vmatpush1.bf16.msra.mxu0 %v1074
    %1098 = vmatprep.subr.bf16.mxu0 0
    %1099 = vmatpush1.bf16.msra.mxu0 %v1075
    %1100 = vmatprep.subr.bf16.mxu0 0
    %1101 = vmatpush1.bf16.msra.mxu0 0
    %1102 = vmatprep.subr.bf16.mxu0 0
    %1103 = vmatpush1.bf16.msra.mxu0 0
    %1104 = vmatprep.subr.bf16.mxu0 0
    %1105 = vmatpush1.bf16.msra.mxu0 0
    %1106 = vmatprep.subr.bf16.mxu0 0
    %1107 = vmatpush1.bf16.msra.mxu0 0
    %1108 = vmatprep.subr.bf16.mxu0 0
    %1109 = vmatpush1.bf16.msra.mxu0 0
    %1110 = vmatprep.subr.bf16.mxu0 0
    %1111 = vmatpush1.bf16.msra.mxu0 0
    %1112 = vmatprep.subr.bf16.mxu0 0
    %1113 = vmatpush1.bf16.msra.mxu0 0
    %1114 = vmatprep.subr.bf16.mxu0 0
    %1115 = vmatpush1.bf16.msra.mxu0 0
    %1116 = vmatprep.mubr.bf16.mxu0 0
    %1117 = vmatmul.mubr.bf16.gmra.mrb[0].mxu0 %v1020
    %v1118 = vpop.f32.mrb[0].mxu0
    %v1119 = vadd.f32 %v986, %v1118
    %v1120 = vpop.f32.mrb[0].mxu0
    %v1121 = vpop.f32.mrb[0].mxu0
    %v1122 = vadd.f32 %v986, %v1121
    %v1123 = vpop.f32.mrb[0].mxu0
    %1124 = vmatprep.mubr.bf16.mxu0 0
    %1125 = vmatmul.mubr.bf16.gmra.mrb[0].mxu0 %v1021
    %v1126 = vpop.f32.mrb[0].mxu0
    %v1127 = vadd.f32 %v986, %v1126
    %v1128 = vpop.f32.mrb[0].mxu0
    %v1129 = vpop.f32.mrb[0].mxu0
    %v1130 = vadd.f32 %v986, %v1129
    %v1131 = vpop.f32.mrb[0].mxu0
    %1132 = vmatprep.mubr.bf16.mxu0 0
    %1133 = vmatmul.mubr.bf16.gmra.mrb[0].mxu0 %v1022
    %v1134 = vpop.f32.mrb[0].mxu0
    %v1135 = vadd.f32 %v986, %v1134
    %v1136 = vpop.f32.mrb[0].mxu0
    %v1137 = vpop.f32.mrb[0].mxu0
    %v1138 = vadd.f32 %v986, %v1137
    %v1139 = vpop.f32.mrb[0].mxu0
    %1140 = vmatprep.mubr.bf16.mxu0 0
    %1141 = vmatmul.mubr.bf16.gmra.mrb[0].mxu0 %v1023
    %v1142 = vpop.f32.mrb[0].mxu0
    %v1143 = vadd.f32 %v986, %v1142
    %v1144 = vpop.f32.mrb[0].mxu0
    %v1145 = vpop.f32.mrb[0].mxu0
    %v1146 = vadd.f32 %v986, %v1145
    %v1147 = vpop.f32.mrb[0].mxu0
    %1148 = vmatprep.mubr.bf16.mxu0 0
    %1149 = vmatmul.mubr.bf16.gmra.mrb[0].mxu0 %v1024
    %v1150 = vpop.f32.mrb[0].mxu0
    %v1151 = vadd.f32 %v986, %v1150
    %v1152 = vpop.f32.mrb[0].mxu0
    %v1153 = vpop.f32.mrb[0].mxu0
    %v1154 = vadd.f32 %v986, %v1153
    %v1155 = vpop.f32.mrb[0].mxu0
    %1156 = vmatprep.mubr.bf16.mxu0 0
    %1157 = vmatmul.mubr.bf16.gmra.mrb[0].mxu0 %v1025
    %v1158 = vpop.f32.mrb[0].mxu0
    %v1159 = vadd.f32 %v986, %v1158
    %v1160 = vpop.f32.mrb[0].mxu0
    %v1161 = vpop.f32.mrb[0].mxu0
    %v1162 = vadd.f32 %v986, %v1161
    %v1163 = vpop.f32.mrb[0].mxu0
    %1164 = vmatprep.mubr.bf16.mxu0 0
    %1165 = vmatmul.mubr.bf16.gmra.mrb[0].mxu0 %v1026
    %v1166 = vpop.f32.mrb[0].mxu0
    %v1167 = vadd.f32 %v986, %v1166
    %v1168 = vpop.f32.mrb[0].mxu0
    %v1169 = vpop.f32.mrb[0].mxu0
    %v1170 = vadd.f32 %v986, %v1169
    %v1171 = vpop.f32.mrb[0].mxu0
    %1172 = vmatprep.mubr.bf16.mxu0 0
    %1173 = vmatmul.mubr.bf16.gmra.mrb[0].mxu0 %v1027
    %v1174 = vpop.f32.mrb[0].mxu0
    %v1175 = vadd.f32 %v986, %v1174
    %v1176 = vpop.f32.mrb[0].mxu0
    %v1177 = vpop.f32.mrb[0].mxu0
    %v1178 = vadd.f32 %v986, %v1177
    %v1179 = vpop.f32.mrb[0].mxu0
    %1180 = vdwg.mxu0
    %v1181 = vmax.f32 %v1119, 0.0
    %v1182 = vmax.f32 %v1122, 0.0
    %v1183 = vmax.f32 %v1127, 0.0
    %v1184 = vmax.f32 %v1130, 0.0
    %v1185 = vmax.f32 %v1135, 0.0
    %v1186 = vmax.f32 %v1138, 0.0
    %v1187 = vmax.f32 %v1143, 0.0
    %v1188 = vmax.f32 %v1146, 0.0
    %v1189 = vmax.f32 %v1151, 0.0
    %v1190 = vmax.f32 %v1154, 0.0
    %v1191 = vmax.f32 %v1159, 0.0
    %v1192 = vmax.f32 %v1162, 0.0
    %v1193 = vmax.f32 %v1167, 0.0
    %v1194 = vmax.f32 %v1170, 0.0
    %v1195 = vmax.f32 %v1175, 0.0
    %v1196 = vmax.f32 %v1178, 0.0
    %v1197 = vpack.c.bf16 %v1182, %v1181
    %v1198 = vpack.c.bf16 %v1184, %v1183
    %v1199 = vpack.c.bf16 %v1186, %v1185
    %v1200 = vpack.c.bf16 %v1188, %v1187
    %v1201 = vpack.c.bf16 %v1190, %v1189
    %v1202 = vpack.c.bf16 %v1192, %v1191
    %v1203 = vpack.c.bf16 %v1194, %v1193
    %v1204 = vpack.c.bf16 %v1196, %v1195
    %v1206 = vlaneseq
    %v1207 = vshrl.u32 %v1206, 7
    %v1208 = vsub.s32 0, %v1207
    %v1209 = vrot.slane %v981, %v1208
    %v1227 = vunpack.c.l.b16 %v965
    %v1228 = vunpack.c.l.b16 %v966
    %v1229 = vunpack.c.l.b16 %v967
    %v1230 = vunpack.c.l.b16 %v968
    %v1231 = vunpack.c.l.b16 %v969
    %v1232 = vunpack.c.l.b16 %v970
    %v1233 = vunpack.c.l.b16 %v971
    %v1234 = vunpack.c.l.b16 %v972
    %v1235 = vunpack.c.l.b16 %v973
    %v1236 = vunpack.c.l.b16 %v974
    %v1237 = vunpack.c.l.b16 %v975
    %v1238 = vunpack.c.l.b16 %v976
    %v1239 = vunpack.c.l.b16 %v977
    %v1240 = vunpack.c.l.b16 %v978
    %v1241 = vunpack.c.l.b16 %v979
    %v1242 = vunpack.c.l.b16 %v980
    %v1243 = vpack.c.b16 %v1228, %v1227
    %v1244 = vpack.c.b16 %v1230, %v1229
    %v1245 = vpack.c.b16 %v1232, %v1231
    %v1246 = vpack.c.b16 %v1234, %v1233
    %v1247 = vpack.c.b16 %v1236, %v1235
    %v1248 = vpack.c.b16 %v1238, %v1237
    %v1249 = vpack.c.b16 %v1240, %v1239
    %v1250 = vpack.c.b16 %v1242, %v1241
    %1259 = vmatprep.subr.bf16.mxu0 0
    %1260 = vmatpush1.bf16.msra.mxu0 %v1243
    %1261 = vmatprep.subr.bf16.mxu0 0
    %1262 = vmatpush1.bf16.msra.mxu0 %v1244
    %1263 = vmatprep.subr.bf16.mxu0 0
    %1264 = vmatpush1.bf16.msra.mxu0 %v1245
    %1265 = vmatprep.subr.bf16.mxu0 0
    %1266 = vmatpush1.bf16.msra.mxu0 %v1246
    %1267 = vmatprep.subr.bf16.mxu0 0
    %1268 = vmatpush1.bf16.msra.mxu0 %v1247
    %1269 = vmatprep.subr.bf16.mxu0 0
    %1270 = vmatpush1.bf16.msra.mxu0 %v1248
    %1271 = vmatprep.subr.bf16.mxu0 0
    %1272 = vmatpush1.bf16.msra.mxu0 %v1249
    %1273 = vmatprep.subr.bf16.mxu0 0
    %1274 = vmatpush1.bf16.msra.mxu0 %v1250
    %1275 = vmatprep.subr.bf16.mxu0 0
    %1276 = vmatpush1.bf16.msra.mxu0 0
    %1277 = vmatprep.subr.bf16.mxu0 0
    %1278 = vmatpush1.bf16.msra.mxu0 0
    %1279 = vmatprep.subr.bf16.mxu0 0
    %1280 = vmatpush1.bf16.msra.mxu0 0
    %1281 = vmatprep.subr.bf16.mxu0 0
    %1282 = vmatpush1.bf16.msra.mxu0 0
    %1283 = vmatprep.subr.bf16.mxu0 0
    %1284 = vmatpush1.bf16.msra.mxu0 0
    %1285 = vmatprep.subr.bf16.mxu0 0
    %1286 = vmatpush1.bf16.msra.mxu0 0
    %1287 = vmatprep.subr.bf16.mxu0 0
    %1288 = vmatpush1.bf16.msra.mxu0 0
    %1289 = vmatprep.subr.bf16.mxu0 0
    %1290 = vmatpush1.bf16.msra.mxu0 0
    %1291 = vmatprep.mubr.bf16.mxu0 0
    %1292 = vmatmul.mubr.bf16.gmra.mrb[0].mxu0 %v1197
    %v1293 = vpop.f32.mrb[0].mxu0
    %v1294 = vadd.f32 %v1209, %v1293
    %v1295 = vpop.f32.mrb[0].mxu0
    %v1296 = vpop.f32.mrb[0].mxu0
    %v1297 = vadd.f32 %v1209, %v1296
    %v1298 = vpop.f32.mrb[0].mxu0
    %1299 = vmatprep.mubr.bf16.mxu0 0
    %1300 = vmatmul.mubr.bf16.gmra.mrb[0].mxu0 %v1198
    %v1301 = vpop.f32.mrb[0].mxu0
    %v1302 = vadd.f32 %v1209, %v1301
    %v1303 = vpop.f32.mrb[0].mxu0
    %v1304 = vpop.f32.mrb[0].mxu0
    %v1305 = vadd.f32 %v1209, %v1304
    %v1306 = vpop.f32.mrb[0].mxu0
    %1307 = vmatprep.mubr.bf16.mxu0 0
    %1308 = vmatmul.mubr.bf16.gmra.mrb[0].mxu0 %v1199
    %v1309 = vpop.f32.mrb[0].mxu0
    %v1310 = vadd.f32 %v1209, %v1309
    %v1311 = vpop.f32.mrb[0].mxu0
    %v1312 = vpop.f32.mrb[0].mxu0
    %v1313 = vadd.f32 %v1209, %v1312
    %v1314 = vpop.f32.mrb[0].mxu0
    %1315 = vmatprep.mubr.bf16.mxu0 0
    %1316 = vmatmul.mubr.bf16.gmra.mrb[0].mxu0 %v1200
    %v1317 = vpop.f32.mrb[0].mxu0
    %v1318 = vadd.f32 %v1209, %v1317
    %v1319 = vpop.f32.mrb[0].mxu0
    %v1320 = vpop.f32.mrb[0].mxu0
    %v1321 = vadd.f32 %v1209, %v1320
    %v1322 = vpop.f32.mrb[0].mxu0
    %1323 = vmatprep.mubr.bf16.mxu0 0
    %1324 = vmatmul.mubr.bf16.gmra.mrb[0].mxu0 %v1201
    %v1325 = vpop.f32.mrb[0].mxu0
    %v1326 = vadd.f32 %v1209, %v1325
    %v1327 = vpop.f32.mrb[0].mxu0
    %v1328 = vpop.f32.mrb[0].mxu0
    %v1329 = vadd.f32 %v1209, %v1328
    %v1330 = vpop.f32.mrb[0].mxu0
    %1331 = vmatprep.mubr.bf16.mxu0 0
    %1332 = vmatmul.mubr.bf16.gmra.mrb[0].mxu0 %v1202
    %v1333 = vpop.f32.mrb[0].mxu0
    %v1334 = vadd.f32 %v1209, %v1333
    %v1335 = vpop.f32.mrb[0].mxu0
    %v1336 = vpop.f32.mrb[0].mxu0
    %v1337 = vadd.f32 %v1209, %v1336
    %v1338 = vpop.f32.mrb[0].mxu0
    %1339 = vmatprep.mubr.bf16.mxu0 0
    %1340 = vmatmul.mubr.bf16.gmra.mrb[0].mxu0 %v1203
    %v1341 = vpop.f32.mrb[0].mxu0
    %v1342 = vadd.f32 %v1209, %v1341
    %v1343 = vpop.f32.mrb[0].mxu0
    %v1344 = vpop.f32.mrb[0].mxu0
    %v1345 = vadd.f32 %v1209, %v1344
    %v1346 = vpop.f32.mrb[0].mxu0
    %1347 = vmatprep.mubr.bf16.mxu0 0
    %1348 = vmatmul.mubr.bf16.gmra.mrb[0].mxu0 %v1204
    %v1349 = vpop.f32.mrb[0].mxu0
    %v1350 = vadd.f32 %v1209, %v1349
    %v1351 = vpop.f32.mrb[0].mxu0
    %v1352 = vpop.f32.mrb[0].mxu0
    %v1353 = vadd.f32 %v1209, %v1352
    %v1354 = vpop.f32.mrb[0].mxu0
    %1355 = vdwg.mxu0
    %v1356 = vmax.f32 %v1294, 0.0
    %v1357 = vmax.f32 %v1297, 0.0
    %v1358 = vmax.f32 %v1302, 0.0
    %v1359 = vmax.f32 %v1305, 0.0
    %v1360 = vmax.f32 %v1310, 0.0
    %v1361 = vmax.f32 %v1313, 0.0
    %v1362 = vmax.f32 %v1318, 0.0
    %v1363 = vmax.f32 %v1321, 0.0
    %v1364 = vmax.f32 %v1326, 0.0
    %v1365 = vmax.f32 %v1329, 0.0
    %v1366 = vmax.f32 %v1334, 0.0
    %v1367 = vmax.f32 %v1337, 0.0
    %v1368 = vmax.f32 %v1342, 0.0
    %v1369 = vmax.f32 %v1345, 0.0
    %v1370 = vmax.f32 %v1350, 0.0
    %v1371 = vmax.f32 %v1353, 0.0
    %v1372 = vunpack.c.l.bf16 %v932
    %v1373 = vunpack.c.l.bf16 %v933
    %v1374 = vunpack.c.l.bf16 %v934
    %v1375 = vunpack.c.l.bf16 %v935
    %v1376 = vunpack.c.l.bf16 %v936
    %v1377 = vunpack.c.l.bf16 %v937
    %v1378 = vunpack.c.l.bf16 %v938
    %v1379 = vunpack.c.l.bf16 %v939
    %v1380 = vunpack.c.l.bf16 %v940
    %v1381 = vunpack.c.l.bf16 %v941
    %v1382 = vunpack.c.l.bf16 %v942
    %v1383 = vunpack.c.l.bf16 %v943
    %v1384 = vunpack.c.l.bf16 %v944
    %v1385 = vunpack.c.l.bf16 %v945
    %v1386 = vunpack.c.l.bf16 %v946
    %v1387 = vunpack.c.l.bf16 %v947
    %v1388 = vadd.f32 %v1356, %v1372
    %v1389 = vadd.f32 %v1357, %v1373
    %v1390 = vadd.f32 %v1358, %v1374
    %v1391 = vadd.f32 %v1359, %v1375
    %v1392 = vadd.f32 %v1360, %v1376
    %v1393 = vadd.f32 %v1361, %v1377
    %v1394 = vadd.f32 %v1362, %v1378
    %v1395 = vadd.f32 %v1363, %v1379
    %v1396 = vadd.f32 %v1364, %v1380
    %v1397 = vadd.f32 %v1365, %v1381
    %v1398 = vadd.f32 %v1366, %v1382
    %v1399 = vadd.f32 %v1367, %v1383
    %v1400 = vadd.f32 %v1368, %v1384
    %v1401 = vadd.f32 %v1369, %v1385
    %v1402 = vadd.f32 %v1370, %v1386
    %v1403 = vadd.f32 %v1371, %v1387
    %v1404 = vpack.c.bf16 %v1389, %v1388
    %v1405 = vpack.c.bf16 %v1391, %v1390
    %v1406 = vpack.c.bf16 %v1393, %v1392
    %v1407 = vpack.c.bf16 %v1395, %v1394
    %v1408 = vpack.c.bf16 %v1397, %v1396
    %v1409 = vpack.c.bf16 %v1399, %v1398
    %v1410 = vpack.c.bf16 %v1401, %v1400
    %v1411 = vpack.c.bf16 %v1403, %v1402
    %v1412 = vld [vmem:[%s12] sm:$0xf]
    %v1413 = vld [vmem:[%s12 + $0x4] sm:$0xf]
    %v1414 = vld [vmem:[%s12 + $0x8] sm:$0xf]
    %v1415 = vld [vmem:[%s12 + $0xc] sm:$0xf]
    %v1416 = vld [vmem:[%s12 + $0x10] sm:$0xf]
    %v1417 = vld [vmem:[%s12 + $0x14] sm:$0xf]
    %v1418 = vld [vmem:[%s12 + $0x18] sm:$0xf]
    %v1419 = vld [vmem:[%s12 + $0x1c] sm:$0xf]
    %v1420 = vld [vmem:[%s12 + $0x20] sm:$0xf]
    %v1421 = vld [vmem:[%s12 + $0x24] sm:$0xf]
    %v1422 = vld [vmem:[%s12 + $0x28] sm:$0xf]
    %v1423 = vld [vmem:[%s12 + $0x2c] sm:$0xf]
    %v1424 = vld [vmem:[%s12 + $0x30] sm:$0xf]
    %v1425 = vld [vmem:[%s12 + $0x34] sm:$0xf]
    %v1426 = vld [vmem:[%s12 + $0x38] sm:$0xf]
    %v1427 = vld [vmem:[%s12 + $0x3c] sm:$0xf]
    %v1428 = vld [vmem:[%s13] sm:$0x1]
    %v1430 = vlaneseq
    %v1431 = vshrl.u32 %v1430, 7
    %v1432 = vsub.s32 0, %v1431
    %v1433 = vrot.slane %v1428, %v1432
    %v1451 = vunpack.c.l.b16 %v1412
    %v1452 = vunpack.c.l.b16 %v1413
    %v1453 = vunpack.c.l.b16 %v1414
    %v1454 = vunpack.c.l.b16 %v1415
    %v1455 = vunpack.c.l.b16 %v1416
    %v1456 = vunpack.c.l.b16 %v1417
    %v1457 = vunpack.c.l.b16 %v1418
    %v1458 = vunpack.c.l.b16 %v1419
    %v1459 = vunpack.c.l.b16 %v1420
    %v1460 = vunpack.c.l.b16 %v1421
    %v1461 = vunpack.c.l.b16 %v1422
    %v1462 = vunpack.c.l.b16 %v1423
    %v1463 = vunpack.c.l.b16 %v1424
    %v1464 = vunpack.c.l.b16 %v1425
    %v1465 = vunpack.c.l.b16 %v1426
    %v1466 = vunpack.c.l.b16 %v1427
    %v1467 = vpack.c.b16 %v1452, %v1451
    %v1468 = vpack.c.b16 %v1454, %v1453
    %v1469 = vpack.c.b16 %v1456, %v1455
    %v1470 = vpack.c.b16 %v1458, %v1457
    %v1471 = vpack.c.b16 %v1460, %v1459
    %v1472 = vpack.c.b16 %v1462, %v1461
    %v1473 = vpack.c.b16 %v1464, %v1463
    %v1474 = vpack.c.b16 %v1466, %v1465
    %1483 = vmatprep.subr.bf16.mxu0 0
    %1484 = vmatpush1.bf16.msra.mxu0 %v1467
    %1485 = vmatprep.subr.bf16.mxu0 0
    %1486 = vmatpush1.bf16.msra.mxu0 %v1468
    %1487 = vmatprep.subr.bf16.mxu0 0
    %1488 = vmatpush1.bf16.msra.mxu0 %v1469
    %1489 = vmatprep.subr.bf16.mxu0 0
    %1490 = vmatpush1.bf16.msra.mxu0 %v1470
    %1491 = vmatprep.subr.bf16.mxu0 0
    %1492 = vmatpush1.bf16.msra.mxu0 %v1471
    %1493 = vmatprep.subr.bf16.mxu0 0
    %1494 = vmatpush1.bf16.msra.mxu0 %v1472
    %1495 = vmatprep.subr.bf16.mxu0 0
    %1496 = vmatpush1.bf16.msra.mxu0 %v1473
    %1497 = vmatprep.subr.bf16.mxu0 0
    %1498 = vmatpush1.bf16.msra.mxu0 %v1474
    %1499 = vmatprep.subr.bf16.mxu0 0
    %1500 = vmatpush1.bf16.msra.mxu0 0
    %1501 = vmatprep.subr.bf16.mxu0 0
    %1502 = vmatpush1.bf16.msra.mxu0 0
    %1503 = vmatprep.subr.bf16.mxu0 0
    %1504 = vmatpush1.bf16.msra.mxu0 0
    %1505 = vmatprep.subr.bf16.mxu0 0
    %1506 = vmatpush1.bf16.msra.mxu0 0
    %1507 = vmatprep.subr.bf16.mxu0 0
    %1508 = vmatpush1.bf16.msra.mxu0 0
    %1509 = vmatprep.subr.bf16.mxu0 0
    %1510 = vmatpush1.bf16.msra.mxu0 0
    %1511 = vmatprep.subr.bf16.mxu0 0
    %1512 = vmatpush1.bf16.msra.mxu0 0
    %1513 = vmatprep.subr.bf16.mxu0 0
    %1514 = vmatpush1.bf16.msra.mxu0 0
    %1515 = vmatprep.mubr.bf16.mxu0 0
    %1516 = vmatmul.mubr.bf16.gmra.mrb[0].mxu0 %v1404
    %v1517 = vpop.f32.mrb[0].mxu0
    %v1518 = vadd.f32 %v1433, %v1517
    %v1519 = vpop.f32.mrb[0].mxu0
    %v1520 = vpop.f32.mrb[0].mxu0
    %v1521 = vadd.f32 %v1433, %v1520
    %v1522 = vpop.f32.mrb[0].mxu0
    %1523 = vmatprep.mubr.bf16.mxu0 0
    %1524 = vmatmul.mubr.bf16.gmra.mrb[0].mxu0 %v1405
    %v1525 = vpop.f32.mrb[0].mxu0
    %v1526 = vadd.f32 %v1433, %v1525
    %v1527 = vpop.f32.mrb[0].mxu0
    %v1528 = vpop.f32.mrb[0].mxu0
    %v1529 = vadd.f32 %v1433, %v1528
    %v1530 = vpop.f32.mrb[0].mxu0
    %1531 = vmatprep.mubr.bf16.mxu0 0
    %1532 = vmatmul.mubr.bf16.gmra.mrb[0].mxu0 %v1406
    %v1533 = vpop.f32.mrb[0].mxu0
    %v1534 = vadd.f32 %v1433, %v1533
    %v1535 = vpop.f32.mrb[0].mxu0
    %v1536 = vpop.f32.mrb[0].mxu0
    %v1537 = vadd.f32 %v1433, %v1536
    %v1538 = vpop.f32.mrb[0].mxu0
    %1539 = vmatprep.mubr.bf16.mxu0 0
    %1540 = vmatmul.mubr.bf16.gmra.mrb[0].mxu0 %v1407
    %v1541 = vpop.f32.mrb[0].mxu0
    %v1542 = vadd.f32 %v1433, %v1541
    %v1543 = vpop.f32.mrb[0].mxu0
    %v1544 = vpop.f32.mrb[0].mxu0
    %v1545 = vadd.f32 %v1433, %v1544
    %v1546 = vpop.f32.mrb[0].mxu0
    %1547 = vmatprep.mubr.bf16.mxu0 0
    %1548 = vmatmul.mubr.bf16.gmra.mrb[0].mxu0 %v1408
    %v1549 = vpop.f32.mrb[0].mxu0
    %v1550 = vadd.f32 %v1433, %v1549
    %v1551 = vpop.f32.mrb[0].mxu0
    %v1552 = vpop.f32.mrb[0].mxu0
    %v1553 = vadd.f32 %v1433, %v1552
    %v1554 = vpop.f32.mrb[0].mxu0
    %1555 = vmatprep.mubr.bf16.mxu0 0
    %1556 = vmatmul.mubr.bf16.gmra.mrb[0].mxu0 %v1409
    %v1557 = vpop.f32.mrb[0].mxu0
    %v1558 = vadd.f32 %v1433, %v1557
    %v1559 = vpop.f32.mrb[0].mxu0
    %v1560 = vpop.f32.mrb[0].mxu0
    %v1561 = vadd.f32 %v1433, %v1560
    %v1562 = vpop.f32.mrb[0].mxu0
    %1563 = vmatprep.mubr.bf16.mxu0 0
    %1564 = vmatmul.mubr.bf16.gmra.mrb[0].mxu0 %v1410
    %v1565 = vpop.f32.mrb[0].mxu0
    %v1566 = vadd.f32 %v1433, %v1565
    %v1567 = vpop.f32.mrb[0].mxu0
    %v1568 = vpop.f32.mrb[0].mxu0
    %v1569 = vadd.f32 %v1433, %v1568
    %v1570 = vpop.f32.mrb[0].mxu0
    %1571 = vmatprep.mubr.bf16.mxu0 0
    %1572 = vmatmul.mubr.bf16.gmra.mrb[0].mxu0 %v1411
    %v1573 = vpop.f32.mrb[0].mxu0
    %v1574 = vadd.f32 %v1433, %v1573
    %v1575 = vpop.f32.mrb[0].mxu0
    %v1576 = vpop.f32.mrb[0].mxu0
    %v1577 = vadd.f32 %v1433, %v1576
    %v1578 = vpop.f32.mrb[0].mxu0
    %1579 = vdwg.mxu0
    %v1580 = vld [vmem:[%s14] sm:$0xff]
    %v1581 = vld [vmem:[%s14 + $0x8] sm:$0xff]
    %v1582 = vld [vmem:[%s14 + $0x10] sm:$0xff]
    %v1583 = vld [vmem:[%s14 + $0x18] sm:$0xff]
    %vm1584 = vnez %v1580
    %vm1585 = vnez %v1581
    %vm1586 = vnez %v1582
    %vm1587 = vnez %v1583
    %v1588 = vsel %vm1584, 16843009, 0
    %v1589 = vsel %vm1585, 16843009, 0
    %v1590 = vsel %vm1586, 16843009, 0
    %v1591 = vsel %vm1587, 16843009, 0
    %v1592 = vunpack.c.0.s8 %v1588
    %v1593 = vunpack.c.1.s8 %v1588
    %v1594 = vunpack.c.2.s8 %v1588
    %v1595 = vunpack.c.3.s8 %v1588
    %v1596 = vunpack.c.0.s8 %v1589
    %v1597 = vunpack.c.1.s8 %v1589
    %v1598 = vunpack.c.2.s8 %v1589
    %v1599 = vunpack.c.3.s8 %v1589
    %v1600 = vunpack.c.0.s8 %v1590
    %v1601 = vunpack.c.1.s8 %v1590
    %v1602 = vunpack.c.2.s8 %v1590
    %v1603 = vunpack.c.3.s8 %v1590
    %v1604 = vunpack.c.0.s8 %v1591
    %v1605 = vunpack.c.1.s8 %v1591
    %v1606 = vunpack.c.2.s8 %v1591
    %v1607 = vunpack.c.3.s8 %v1591
    %v1608 = vpack.c.b16 %v1592, %v1592
    %v1609 = vpack.c.b8 %v1608, %v1608
    %v1610 = vpack.c.b16 %v1593, %v1593
    %v1611 = vpack.c.b8 %v1610, %v1610
    %v1612 = vpack.c.b16 %v1594, %v1594
    %v1613 = vpack.c.b8 %v1612, %v1612
    %v1614 = vpack.c.b16 %v1595, %v1595
    %v1615 = vpack.c.b8 %v1614, %v1614
    %v1616 = vpack.c.b16 %v1596, %v1596
    %v1617 = vpack.c.b8 %v1616, %v1616
    %v1618 = vpack.c.b16 %v1597, %v1597
    %v1619 = vpack.c.b8 %v1618, %v1618
    %v1620 = vpack.c.b16 %v1598, %v1598
    %v1621 = vpack.c.b8 %v1620, %v1620
    %v1622 = vpack.c.b16 %v1599, %v1599
    %v1623 = vpack.c.b8 %v1622, %v1622
    %v1624 = vpack.c.b16 %v1600, %v1600
    %v1625 = vpack.c.b8 %v1624, %v1624
    %v1626 = vpack.c.b16 %v1601, %v1601
    %v1627 = vpack.c.b8 %v1626, %v1626
    %v1628 = vpack.c.b16 %v1602, %v1602
    %v1629 = vpack.c.b8 %v1628, %v1628
    %v1630 = vpack.c.b16 %v1603, %v1603
    %v1631 = vpack.c.b8 %v1630, %v1630
    %v1632 = vpack.c.b16 %v1604, %v1604
    %v1633 = vpack.c.b8 %v1632, %v1632
    %v1634 = vpack.c.b16 %v1605, %v1605
    %v1635 = vpack.c.b8 %v1634, %v1634
    %v1636 = vpack.c.b16 %v1606, %v1606
    %v1637 = vpack.c.b8 %v1636, %v1636
    %v1638 = vpack.c.b16 %v1607, %v1607
    %v1639 = vpack.c.b8 %v1638, %v1638
    %vm1640 = vnez %v1609
    %vm1641 = vnez %v1611
    %vm1642 = vnez %v1613
    %vm1643 = vnez %v1615
    %vm1644 = vnez %v1617
    %vm1645 = vnez %v1619
    %vm1646 = vnez %v1621
    %vm1647 = vnez %v1623
    %vm1648 = vnez %v1625
    %vm1649 = vnez %v1627
    %vm1650 = vnez %v1629
    %vm1651 = vnez %v1631
    %vm1652 = vnez %v1633
    %vm1653 = vnez %v1635
    %vm1654 = vnez %v1637
    %vm1655 = vnez %v1639
    %v1656 = vsel %vm1640, 16843009, 0
    %v1657 = vsel %vm1641, 16843009, 0
    %v1658 = vsel %vm1642, 16843009, 0
    %v1659 = vsel %vm1643, 16843009, 0
    %v1660 = vsel %vm1644, 16843009, 0
    %v1661 = vsel %vm1645, 16843009, 0
    %v1662 = vsel %vm1646, 16843009, 0
    %v1663 = vsel %vm1647, 16843009, 0
    %v1664 = vsel %vm1648, 16843009, 0
    %v1665 = vsel %vm1649, 16843009, 0
    %v1666 = vsel %vm1650, 16843009, 0
    %v1667 = vsel %vm1651, 16843009, 0
    %v1668 = vsel %vm1652, 16843009, 0
    %v1669 = vsel %vm1653, 16843009, 0
    %v1670 = vsel %vm1654, 16843009, 0
    %v1671 = vsel %vm1655, 16843009, 0
    %v1672 = vunpack.c.0.s8 %v1656
    %v1673 = vunpack.c.0.s8 %v1657
    %v1674 = vunpack.c.0.s8 %v1658
    %v1675 = vunpack.c.0.s8 %v1659
    %v1676 = vunpack.c.0.s8 %v1660
    %v1677 = vunpack.c.0.s8 %v1661
    %v1678 = vunpack.c.0.s8 %v1662
    %v1679 = vunpack.c.0.s8 %v1663
    %v1680 = vunpack.c.0.s8 %v1664
    %v1681 = vunpack.c.0.s8 %v1665
    %v1682 = vunpack.c.0.s8 %v1666
    %v1683 = vunpack.c.0.s8 %v1667
    %v1684 = vunpack.c.0.s8 %v1668
    %v1685 = vunpack.c.0.s8 %v1669
    %v1686 = vunpack.c.0.s8 %v1670
    %v1687 = vunpack.c.0.s8 %v1671
    %vm1688 = vcmp.ne.s32.totalorder %v1672, 0
    %vm1689 = vcmp.ne.s32.totalorder %v1673, 0
    %vm1690 = vcmp.ne.s32.totalorder %v1674, 0
    %vm1691 = vcmp.ne.s32.totalorder %v1675, 0
    %vm1692 = vcmp.ne.s32.totalorder %v1676, 0
    %vm1693 = vcmp.ne.s32.totalorder %v1677, 0
    %vm1694 = vcmp.ne.s32.totalorder %v1678, 0
    %vm1695 = vcmp.ne.s32.totalorder %v1679, 0
    %vm1696 = vcmp.ne.s32.totalorder %v1680, 0
    %vm1697 = vcmp.ne.s32.totalorder %v1681, 0
    %vm1698 = vcmp.ne.s32.totalorder %v1682, 0
    %vm1699 = vcmp.ne.s32.totalorder %v1683, 0
    %vm1700 = vcmp.ne.s32.totalorder %v1684, 0
    %vm1701 = vcmp.ne.s32.totalorder %v1685, 0
    %vm1702 = vcmp.ne.s32.totalorder %v1686, 0
    %vm1703 = vcmp.ne.s32.totalorder %v1687, 0
    %v1704 = vsel %vm1688, %v1518, -1e+30
    %v1705 = vsel %vm1689, %v1521, -1e+30
    %v1706 = vsel %vm1690, %v1526, -1e+30
    %v1707 = vsel %vm1691, %v1529, -1e+30
    %v1708 = vsel %vm1692, %v1534, -1e+30
    %v1709 = vsel %vm1693, %v1537, -1e+30
    %v1710 = vsel %vm1694, %v1542, -1e+30
    %v1711 = vsel %vm1695, %v1545, -1e+30
    %v1712 = vsel %vm1696, %v1550, -1e+30
    %v1713 = vsel %vm1697, %v1553, -1e+30
    %v1714 = vsel %vm1698, %v1558, -1e+30
    %v1715 = vsel %vm1699, %v1561, -1e+30
    %v1716 = vsel %vm1700, %v1566, -1e+30
    %v1717 = vsel %vm1701, %v1569, -1e+30
    %v1718 = vsel %vm1702, %v1574, -1e+30
    %v1719 = vsel %vm1703, %v1577, -1e+30
    %1720 = vmax.xlane.f32.xlu0 %v1704
    %v1721 = vpop.xlane.xlu0 %1720
    %1722 = vmax.xlane.f32.xlu0 %v1705
    %v1723 = vpop.xlane.xlu0 %1722
    %1724 = vmax.xlane.f32.xlu0 %v1706
    %v1725 = vpop.xlane.xlu0 %1724
    %1726 = vmax.xlane.f32.xlu0 %v1707
    %v1727 = vpop.xlane.xlu0 %1726
    %1728 = vmax.xlane.f32.xlu0 %v1708
    %v1729 = vpop.xlane.xlu0 %1728
    %1730 = vmax.xlane.f32.xlu0 %v1709
    %v1731 = vpop.xlane.xlu0 %1730
    %1732 = vmax.xlane.f32.xlu0 %v1710
    %v1733 = vpop.xlane.xlu0 %1732
    %1734 = vmax.xlane.f32.xlu0 %v1711
    %v1735 = vpop.xlane.xlu0 %1734
    %1736 = vmax.xlane.f32.xlu0 %v1712
    %v1737 = vpop.xlane.xlu0 %1736
    %1738 = vmax.xlane.f32.xlu0 %v1713
    %v1739 = vpop.xlane.xlu0 %1738
    %1740 = vmax.xlane.f32.xlu0 %v1714
    %v1741 = vpop.xlane.xlu0 %1740
    %1742 = vmax.xlane.f32.xlu0 %v1715
    %v1743 = vpop.xlane.xlu0 %1742
    %1744 = vmax.xlane.f32.xlu0 %v1716
    %v1745 = vpop.xlane.xlu0 %1744
    %1746 = vmax.xlane.f32.xlu0 %v1717
    %v1747 = vpop.xlane.xlu0 %1746
    %1748 = vmax.xlane.f32.xlu0 %v1718
    %v1749 = vpop.xlane.xlu0 %1748
    %1750 = vmax.xlane.f32.xlu0 %v1719
    %v1751 = vpop.xlane.xlu0 %1750
    %v1752 = vsub.f32 %v1704, %v1721
    %v1753 = vsub.f32 %v1705, %v1723
    %v1754 = vsub.f32 %v1706, %v1725
    %v1755 = vsub.f32 %v1707, %v1727
    %v1756 = vsub.f32 %v1708, %v1729
    %v1757 = vsub.f32 %v1709, %v1731
    %v1758 = vsub.f32 %v1710, %v1733
    %v1759 = vsub.f32 %v1711, %v1735
    %v1760 = vsub.f32 %v1712, %v1737
    %v1761 = vsub.f32 %v1713, %v1739
    %v1762 = vsub.f32 %v1714, %v1741
    %v1763 = vsub.f32 %v1715, %v1743
    %v1764 = vsub.f32 %v1716, %v1745
    %v1765 = vsub.f32 %v1717, %v1747
    %v1766 = vsub.f32 %v1718, %v1749
    %v1767 = vsub.f32 %v1719, %v1751
    %v1768 = vmul.f32 %v1752, 1.442695
    %v1769 = vpow.pop %v1768
    %v1770 = vmul.f32 %v1753, 1.442695
    %v1771 = vpow.pop %v1770
    %v1772 = vmul.f32 %v1754, 1.442695
    %v1773 = vpow.pop %v1772
    %v1774 = vmul.f32 %v1755, 1.442695
    %v1775 = vpow.pop %v1774
    %v1776 = vmul.f32 %v1756, 1.442695
    %v1777 = vpow.pop %v1776
    %v1778 = vmul.f32 %v1757, 1.442695
    %v1779 = vpow.pop %v1778
    %v1780 = vmul.f32 %v1758, 1.442695
    %v1781 = vpow.pop %v1780
    %v1782 = vmul.f32 %v1759, 1.442695
    %v1783 = vpow.pop %v1782
    %v1784 = vmul.f32 %v1760, 1.442695
    %v1785 = vpow.pop %v1784
    %v1786 = vmul.f32 %v1761, 1.442695
    %v1787 = vpow.pop %v1786
    %v1788 = vmul.f32 %v1762, 1.442695
    %v1789 = vpow.pop %v1788
    %v1790 = vmul.f32 %v1763, 1.442695
    %v1791 = vpow.pop %v1790
    %v1792 = vmul.f32 %v1764, 1.442695
    %v1793 = vpow.pop %v1792
    %v1794 = vmul.f32 %v1765, 1.442695
    %v1795 = vpow.pop %v1794
    %v1796 = vmul.f32 %v1766, 1.442695
    %v1797 = vpow.pop %v1796
    %v1798 = vmul.f32 %v1767, 1.442695
    %v1799 = vpow.pop %v1798
    %1800 = vadd.xlane.f32.xlu0 %v1769
    %v1801 = vpop.xlane.xlu0 %1800
    %1802 = vadd.xlane.f32.xlu0 %v1771
    %v1803 = vpop.xlane.xlu0 %1802
    %1804 = vadd.xlane.f32.xlu0 %v1773
    %v1805 = vpop.xlane.xlu0 %1804
    %1806 = vadd.xlane.f32.xlu0 %v1775
    %v1807 = vpop.xlane.xlu0 %1806
    %1808 = vadd.xlane.f32.xlu0 %v1777
    %v1809 = vpop.xlane.xlu0 %1808
    %1810 = vadd.xlane.f32.xlu0 %v1779
    %v1811 = vpop.xlane.xlu0 %1810
    %1812 = vadd.xlane.f32.xlu0 %v1781
    %v1813 = vpop.xlane.xlu0 %1812
    %1814 = vadd.xlane.f32.xlu0 %v1783
    %v1815 = vpop.xlane.xlu0 %1814
    %1816 = vadd.xlane.f32.xlu0 %v1785
    %v1817 = vpop.xlane.xlu0 %1816
    %1818 = vadd.xlane.f32.xlu0 %v1787
    %v1819 = vpop.xlane.xlu0 %1818
    %1820 = vadd.xlane.f32.xlu0 %v1789
    %v1821 = vpop.xlane.xlu0 %1820
    %1822 = vadd.xlane.f32.xlu0 %v1791
    %v1823 = vpop.xlane.xlu0 %1822
    %1824 = vadd.xlane.f32.xlu0 %v1793
    %v1825 = vpop.xlane.xlu0 %1824
    %1826 = vadd.xlane.f32.xlu0 %v1795
    %v1827 = vpop.xlane.xlu0 %1826
    %1828 = vadd.xlane.f32.xlu0 %v1797
    %v1829 = vpop.xlane.xlu0 %1828
    %1830 = vadd.xlane.f32.xlu0 %v1799
    %v1831 = vpop.xlane.xlu0 %1830
    %v1832 = vlog2.pop %v1801
    %v1833 = vmul.f32 %v1832, 0.6931472
    %v1834 = vlog2.pop %v1803
    %v1835 = vmul.f32 %v1834, 0.6931472
    %v1836 = vlog2.pop %v1805
    %v1837 = vmul.f32 %v1836, 0.6931472
    %v1838 = vlog2.pop %v1807
    %v1839 = vmul.f32 %v1838, 0.6931472
    %v1840 = vlog2.pop %v1809
    %v1841 = vmul.f32 %v1840, 0.6931472
    %v1842 = vlog2.pop %v1811
    %v1843 = vmul.f32 %v1842, 0.6931472
    %v1844 = vlog2.pop %v1813
    %v1845 = vmul.f32 %v1844, 0.6931472
    %v1846 = vlog2.pop %v1815
    %v1847 = vmul.f32 %v1846, 0.6931472
    %v1848 = vlog2.pop %v1817
    %v1849 = vmul.f32 %v1848, 0.6931472
    %v1850 = vlog2.pop %v1819
    %v1851 = vmul.f32 %v1850, 0.6931472
    %v1852 = vlog2.pop %v1821
    %v1853 = vmul.f32 %v1852, 0.6931472
    %v1854 = vlog2.pop %v1823
    %v1855 = vmul.f32 %v1854, 0.6931472
    %v1856 = vlog2.pop %v1825
    %v1857 = vmul.f32 %v1856, 0.6931472
    %v1858 = vlog2.pop %v1827
    %v1859 = vmul.f32 %v1858, 0.6931472
    %v1860 = vlog2.pop %v1829
    %v1861 = vmul.f32 %v1860, 0.6931472
    %v1862 = vlog2.pop %v1831
    %v1863 = vmul.f32 %v1862, 0.6931472
    %v1864 = vadd.f32 %v1721, %v1833
    %v1865 = vadd.f32 %v1723, %v1835
    %v1866 = vadd.f32 %v1725, %v1837
    %v1867 = vadd.f32 %v1727, %v1839
    %v1868 = vadd.f32 %v1729, %v1841
    %v1869 = vadd.f32 %v1731, %v1843
    %v1870 = vadd.f32 %v1733, %v1845
    %v1871 = vadd.f32 %v1735, %v1847
    %v1872 = vadd.f32 %v1737, %v1849
    %v1873 = vadd.f32 %v1739, %v1851
    %v1874 = vadd.f32 %v1741, %v1853
    %v1875 = vadd.f32 %v1743, %v1855
    %v1876 = vadd.f32 %v1745, %v1857
    %v1877 = vadd.f32 %v1747, %v1859
    %v1878 = vadd.f32 %v1749, %v1861
    %v1879 = vadd.f32 %v1751, %v1863
    %v1880 = vsub.f32 %v1704, %v1864
    %v1881 = vsub.f32 %v1705, %v1865
    %v1882 = vsub.f32 %v1706, %v1866
    %v1883 = vsub.f32 %v1707, %v1867
    %v1884 = vsub.f32 %v1708, %v1868
    %v1885 = vsub.f32 %v1709, %v1869
    %v1886 = vsub.f32 %v1710, %v1870
    %v1887 = vsub.f32 %v1711, %v1871
    %v1888 = vsub.f32 %v1712, %v1872
    %v1889 = vsub.f32 %v1713, %v1873
    %v1890 = vsub.f32 %v1714, %v1874
    %v1891 = vsub.f32 %v1715, %v1875
    %v1892 = vsub.f32 %v1716, %v1876
    %v1893 = vsub.f32 %v1717, %v1877
    %v1894 = vsub.f32 %v1718, %v1878
    %v1895 = vsub.f32 %v1719, %v1879
    %1896 = vst [vmem:[%s21] sm:$0xff] %v1880
    %1897 = vst [vmem:[%s21 + $0x8] sm:$0xff] %v1881
    %1898 = vst [vmem:[%s21 + $0x10] sm:$0xff] %v1882
    %1899 = vst [vmem:[%s21 + $0x18] sm:$0xff] %v1883
    %1900 = vst [vmem:[%s21 + $0x20] sm:$0xff] %v1884
    %1901 = vst [vmem:[%s21 + $0x28] sm:$0xff] %v1885
    %1902 = vst [vmem:[%s21 + $0x30] sm:$0xff] %v1886
    %1903 = vst [vmem:[%s21 + $0x38] sm:$0xff] %v1887
    %1904 = vst [vmem:[%s21 + $0x40] sm:$0xff] %v1888
    %1905 = vst [vmem:[%s21 + $0x48] sm:$0xff] %v1889
    %1906 = vst [vmem:[%s21 + $0x50] sm:$0xff] %v1890
    %1907 = vst [vmem:[%s21 + $0x58] sm:$0xff] %v1891
    %1908 = vst [vmem:[%s21 + $0x60] sm:$0xff] %v1892
    %1909 = vst [vmem:[%s21 + $0x68] sm:$0xff] %v1893
    %1910 = vst [vmem:[%s21 + $0x70] sm:$0xff] %v1894
    %1911 = vst [vmem:[%s21 + $0x78] sm:$0xff] %v1895
    %v1912 = vld [vmem:[%s2] sm:$0xf]
    %v1913 = vld [vmem:[%s2 + $0x4] sm:$0xf]
    %v1914 = vld [vmem:[%s2 + $0x8] sm:$0xf]
    %v1915 = vld [vmem:[%s2 + $0xc] sm:$0xf]
    %v1916 = vld [vmem:[%s2 + $0x10] sm:$0xf]
    %v1917 = vld [vmem:[%s2 + $0x14] sm:$0xf]
    %v1918 = vld [vmem:[%s2 + $0x18] sm:$0xf]
    %v1919 = vld [vmem:[%s2 + $0x1c] sm:$0xf]
    %v1920 = vld [vmem:[%s2 + $0x20] sm:$0xf]
    %v1921 = vld [vmem:[%s2 + $0x24] sm:$0xf]
    %v1922 = vld [vmem:[%s2 + $0x28] sm:$0xf]
    %v1923 = vld [vmem:[%s2 + $0x2c] sm:$0xf]
    %v1924 = vld [vmem:[%s2 + $0x30] sm:$0xf]
    %v1925 = vld [vmem:[%s2 + $0x34] sm:$0xf]
    %v1926 = vld [vmem:[%s2 + $0x38] sm:$0xf]
    %v1927 = vld [vmem:[%s2 + $0x3c] sm:$0xf]
    %v1928 = vld [vmem:[#allocation2] sm:$0xf]
    %v1929 = vld [vmem:[#allocation2 + $0x4] sm:$0xf]
    %v1930 = vld [vmem:[#allocation2 + $0x8] sm:$0xf]
    %v1931 = vld [vmem:[#allocation2 + $0xc] sm:$0xf]
    %v1932 = vld [vmem:[#allocation2 + $0x10] sm:$0xf]
    %v1933 = vld [vmem:[#allocation2 + $0x14] sm:$0xf]
    %v1934 = vld [vmem:[#allocation2 + $0x18] sm:$0xf]
    %v1935 = vld [vmem:[#allocation2 + $0x1c] sm:$0xf]
    %v1936 = vld [vmem:[#allocation2 + $0x20] sm:$0xf]
    %v1937 = vld [vmem:[#allocation2 + $0x24] sm:$0xf]
    %v1938 = vld [vmem:[#allocation2 + $0x28] sm:$0xf]
    %v1939 = vld [vmem:[#allocation2 + $0x2c] sm:$0xf]
    %v1940 = vld [vmem:[#allocation2 + $0x30] sm:$0xf]
    %v1941 = vld [vmem:[#allocation2 + $0x34] sm:$0xf]
    %v1942 = vld [vmem:[#allocation2 + $0x38] sm:$0xf]
    %v1943 = vld [vmem:[#allocation2 + $0x3c] sm:$0xf]
    %v1944 = vld [vmem:[%s16] sm:$0x1]
    %v1945 = vld [vmem:[#allocation4] sm:$0xf]
    %v1946 = vld [vmem:[#allocation4 + $0x4] sm:$0xf]
    %v1947 = vld [vmem:[#allocation4 + $0x8] sm:$0xf]
    %v1948 = vld [vmem:[#allocation4 + $0xc] sm:$0xf]
    %v1949 = vld [vmem:[#allocation4 + $0x10] sm:$0xf]
    %v1950 = vld [vmem:[#allocation4 + $0x14] sm:$0xf]
    %v1951 = vld [vmem:[#allocation4 + $0x18] sm:$0xf]
    %v1952 = vld [vmem:[#allocation4 + $0x1c] sm:$0xf]
    %v1953 = vld [vmem:[#allocation4 + $0x20] sm:$0xf]
    %v1954 = vld [vmem:[#allocation4 + $0x24] sm:$0xf]
    %v1955 = vld [vmem:[#allocation4 + $0x28] sm:$0xf]
    %v1956 = vld [vmem:[#allocation4 + $0x2c] sm:$0xf]
    %v1957 = vld [vmem:[#allocation4 + $0x30] sm:$0xf]
    %v1958 = vld [vmem:[#allocation4 + $0x34] sm:$0xf]
    %v1959 = vld [vmem:[#allocation4 + $0x38] sm:$0xf]
    %v1960 = vld [vmem:[#allocation4 + $0x3c] sm:$0xf]
    %v1961 = vld [vmem:[%s18] sm:$0x1]
    %v1963 = vlaneseq
    %v1964 = vshrl.u32 %v1963, 7
    %v1965 = vsub.s32 0, %v1964
    %v1966 = vrot.slane %v1944, %v1965
    %v1984 = vunpack.c.l.b16 %v1912
    %v1985 = vunpack.c.l.b16 %v1913
    %v1986 = vunpack.c.l.b16 %v1914
    %v1987 = vunpack.c.l.b16 %v1915
    %v1988 = vunpack.c.l.b16 %v1916
    %v1989 = vunpack.c.l.b16 %v1917
    %v1990 = vunpack.c.l.b16 %v1918
    %v1991 = vunpack.c.l.b16 %v1919
    %v1992 = vunpack.c.l.b16 %v1920
    %v1993 = vunpack.c.l.b16 %v1921
    %v1994 = vunpack.c.l.b16 %v1922
    %v1995 = vunpack.c.l.b16 %v1923
    %v1996 = vunpack.c.l.b16 %v1924
    %v1997 = vunpack.c.l.b16 %v1925
    %v1998 = vunpack.c.l.b16 %v1926
    %v1999 = vunpack.c.l.b16 %v1927
    %v2000 = vpack.c.b16 %v1985, %v1984
    %v2001 = vpack.c.b16 %v1987, %v1986
    %v2002 = vpack.c.b16 %v1989, %v1988
    %v2003 = vpack.c.b16 %v1991, %v1990
    %v2004 = vpack.c.b16 %v1993, %v1992
    %v2005 = vpack.c.b16 %v1995, %v1994
    %v2006 = vpack.c.b16 %v1997, %v1996
    %v2007 = vpack.c.b16 %v1999, %v1998
    %v2032 = vunpack.c.l.b16 %v1928
    %v2033 = vunpack.c.l.b16 %v1929
    %v2034 = vunpack.c.l.b16 %v1930
    %v2035 = vunpack.c.l.b16 %v1931
    %v2036 = vunpack.c.l.b16 %v1932
    %v2037 = vunpack.c.l.b16 %v1933
    %v2038 = vunpack.c.l.b16 %v1934
    %v2039 = vunpack.c.l.b16 %v1935
    %v2040 = vunpack.c.l.b16 %v1936
    %v2041 = vunpack.c.l.b16 %v1937
    %v2042 = vunpack.c.l.b16 %v1938
    %v2043 = vunpack.c.l.b16 %v1939
    %v2044 = vunpack.c.l.b16 %v1940
    %v2045 = vunpack.c.l.b16 %v1941
    %v2046 = vunpack.c.l.b16 %v1942
    %v2047 = vunpack.c.l.b16 %v1943
    %v2048 = vpack.c.b16 %v2033, %v2032
    %v2049 = vpack.c.b16 %v2035, %v2034
    %v2050 = vpack.c.b16 %v2037, %v2036
    %v2051 = vpack.c.b16 %v2039, %v2038
    %v2052 = vpack.c.b16 %v2041, %v2040
    %v2053 = vpack.c.b16 %v2043, %v2042
    %v2054 = vpack.c.b16 %v2045, %v2044
    %v2055 = vpack.c.b16 %v2047, %v2046
    %2064 = vmatprep.subr.bf16.mxu0 0
    %2065 = vmatpush1.bf16.msra.mxu0 %v2048
    %2066 = vmatprep.subr.bf16.mxu0 0
    %2067 = vmatpush1.bf16.msra.mxu0 %v2049
    %2068 = vmatprep.subr.bf16.mxu0 0
    %2069 = vmatpush1.bf16.msra.mxu0 %v2050
    %2070 = vmatprep.subr.bf16.mxu0 0
    %2071 = vmatpush1.bf16.msra.mxu0 %v2051
    %2072 = vmatprep.subr.bf16.mxu0 0
    %2073 = vmatpush1.bf16.msra.mxu0 %v2052
    %2074 = vmatprep.subr.bf16.mxu0 0
    %2075 = vmatpush1.bf16.msra.mxu0 %v2053
    %2076 = vmatprep.subr.bf16.mxu0 0
    %2077 = vmatpush1.bf16.msra.mxu0 %v2054
    %2078 = vmatprep.subr.bf16.mxu0 0
    %2079 = vmatpush1.bf16.msra.mxu0 %v2055
    %2080 = vmatprep.subr.bf16.mxu0 0
    %2081 = vmatpush1.bf16.msra.mxu0 0
    %2082 = vmatprep.subr.bf16.mxu0 0
    %2083 = vmatpush1.bf16.msra.mxu0 0
    %2084 = vmatprep.subr.bf16.mxu0 0
    %2085 = vmatpush1.bf16.msra.mxu0 0
    %2086 = vmatprep.subr.bf16.mxu0 0
    %2087 = vmatpush1.bf16.msra.mxu0 0
    %2088 = vmatprep.subr.bf16.mxu0 0
    %2089 = vmatpush1.bf16.msra.mxu0 0
    %2090 = vmatprep.subr.bf16.mxu0 0
    %2091 = vmatpush1.bf16.msra.mxu0 0
    %2092 = vmatprep.subr.bf16.mxu0 0
    %2093 = vmatpush1.bf16.msra.mxu0 0
    %2094 = vmatprep.subr.bf16.mxu0 0
    %2095 = vmatpush1.bf16.msra.mxu0 0
    %2096 = vmatprep.mubr.bf16.mxu0 0
    %2097 = vmatmul.mubr.bf16.gmra.mrb[0].mxu0 %v2000
    %v2098 = vpop.f32.mrb[0].mxu0
    %v2099 = vadd.f32 %v1966, %v2098
    %v2100 = vpop.f32.mrb[0].mxu0
    %v2101 = vpop.f32.mrb[0].mxu0
    %v2102 = vadd.f32 %v1966, %v2101
    %v2103 = vpop.f32.mrb[0].mxu0
    %2104 = vmatprep.mubr.bf16.mxu0 0
    %2105 = vmatmul.mubr.bf16.gmra.mrb[0].mxu0 %v2001
    %v2106 = vpop.f32.mrb[0].mxu0
    %v2107 = vadd.f32 %v1966, %v2106
    %v2108 = vpop.f32.mrb[0].mxu0
    %v2109 = vpop.f32.mrb[0].mxu0
    %v2110 = vadd.f32 %v1966, %v2109
    %v2111 = vpop.f32.mrb[0].mxu0
    %2112 = vmatprep.mubr.bf16.mxu0 0
    %2113 = vmatmul.mubr.bf16.gmra.mrb[0].mxu0 %v2002
    %v2114 = vpop.f32.mrb[0].mxu0
    %v2115 = vadd.f32 %v1966, %v2114
    %v2116 = vpop.f32.mrb[0].mxu0
    %v2117 = vpop.f32.mrb[0].mxu0
    %v2118 = vadd.f32 %v1966, %v2117
    %v2119 = vpop.f32.mrb[0].mxu0
    %2120 = vmatprep.mubr.bf16.mxu0 0
    %2121 = vmatmul.mubr.bf16.gmra.mrb[0].mxu0 %v2003
    %v2122 = vpop.f32.mrb[0].mxu0
    %v2123 = vadd.f32 %v1966, %v2122
    %v2124 = vpop.f32.mrb[0].mxu0
    %v2125 = vpop.f32.mrb[0].mxu0
    %v2126 = vadd.f32 %v1966, %v2125
    %v2127 = vpop.f32.mrb[0].mxu0
    %2128 = vmatprep.mubr.bf16.mxu0 0
    %2129 = vmatmul.mubr.bf16.gmra.mrb[0].mxu0 %v2004
    %v2130 = vpop.f32.mrb[0].mxu0
    %v2131 = vadd.f32 %v1966, %v2130
    %v2132 = vpop.f32.mrb[0].mxu0
    %v2133 = vpop.f32.mrb[0].mxu0
    %v2134 = vadd.f32 %v1966, %v2133
    %v2135 = vpop.f32.mrb[0].mxu0
    %2136 = vmatprep.mubr.bf16.mxu0 0
    %2137 = vmatmul.mubr.bf16.gmra.mrb[0].mxu0 %v2005
    %v2138 = vpop.f32.mrb[0].mxu0
    %v2139 = vadd.f32 %v1966, %v2138
    %v2140 = vpop.f32.mrb[0].mxu0
    %v2141 = vpop.f32.mrb[0].mxu0
    %v2142 = vadd.f32 %v1966, %v2141
    %v2143 = vpop.f32.mrb[0].mxu0
    %2144 = vmatprep.mubr.bf16.mxu0 0
    %2145 = vmatmul.mubr.bf16.gmra.mrb[0].mxu0 %v2006
    %v2146 = vpop.f32.mrb[0].mxu0
    %v2147 = vadd.f32 %v1966, %v2146
    %v2148 = vpop.f32.mrb[0].mxu0
    %v2149 = vpop.f32.mrb[0].mxu0
    %v2150 = vadd.f32 %v1966, %v2149
    %v2151 = vpop.f32.mrb[0].mxu0
    %2152 = vmatprep.mubr.bf16.mxu0 0
    %2153 = vmatmul.mubr.bf16.gmra.mrb[0].mxu0 %v2007
    %v2154 = vpop.f32.mrb[0].mxu0
    %v2155 = vadd.f32 %v1966, %v2154
    %v2156 = vpop.f32.mrb[0].mxu0
    %v2157 = vpop.f32.mrb[0].mxu0
    %v2158 = vadd.f32 %v1966, %v2157
    %v2159 = vpop.f32.mrb[0].mxu0
    %2160 = vdwg.mxu0
    %v2161 = vmax.f32 %v2099, 0.0
    %v2162 = vmax.f32 %v2102, 0.0
    %v2163 = vmax.f32 %v2107, 0.0
    %v2164 = vmax.f32 %v2110, 0.0
    %v2165 = vmax.f32 %v2115, 0.0
    %v2166 = vmax.f32 %v2118, 0.0
    %v2167 = vmax.f32 %v2123, 0.0
    %v2168 = vmax.f32 %v2126, 0.0
    %v2169 = vmax.f32 %v2131, 0.0
    %v2170 = vmax.f32 %v2134, 0.0
    %v2171 = vmax.f32 %v2139, 0.0
    %v2172 = vmax.f32 %v2142, 0.0
    %v2173 = vmax.f32 %v2147, 0.0
    %v2174 = vmax.f32 %v2150, 0.0
    %v2175 = vmax.f32 %v2155, 0.0
    %v2176 = vmax.f32 %v2158, 0.0
    %v2177 = vpack.c.bf16 %v2162, %v2161
    %v2178 = vpack.c.bf16 %v2164, %v2163
    %v2179 = vpack.c.bf16 %v2166, %v2165
    %v2180 = vpack.c.bf16 %v2168, %v2167
    %v2181 = vpack.c.bf16 %v2170, %v2169
    %v2182 = vpack.c.bf16 %v2172, %v2171
    %v2183 = vpack.c.bf16 %v2174, %v2173
    %v2184 = vpack.c.bf16 %v2176, %v2175
    %v2186 = vlaneseq
    %v2187 = vshrl.u32 %v2186, 7
    %v2188 = vsub.s32 0, %v2187
    %v2189 = vrot.slane %v1961, %v2188
    %v2207 = vunpack.c.l.b16 %v1945
    %v2208 = vunpack.c.l.b16 %v1946
    %v2209 = vunpack.c.l.b16 %v1947
    %v2210 = vunpack.c.l.b16 %v1948
    %v2211 = vunpack.c.l.b16 %v1949
    %v2212 = vunpack.c.l.b16 %v1950
    %v2213 = vunpack.c.l.b16 %v1951
    %v2214 = vunpack.c.l.b16 %v1952
    %v2215 = vunpack.c.l.b16 %v1953
    %v2216 = vunpack.c.l.b16 %v1954
    %v2217 = vunpack.c.l.b16 %v1955
    %v2218 = vunpack.c.l.b16 %v1956
    %v2219 = vunpack.c.l.b16 %v1957
    %v2220 = vunpack.c.l.b16 %v1958
    %v2221 = vunpack.c.l.b16 %v1959
    %v2222 = vunpack.c.l.b16 %v1960
    %v2223 = vpack.c.b16 %v2208, %v2207
    %v2224 = vpack.c.b16 %v2210, %v2209
    %v2225 = vpack.c.b16 %v2212, %v2211
    %v2226 = vpack.c.b16 %v2214, %v2213
    %v2227 = vpack.c.b16 %v2216, %v2215
    %v2228 = vpack.c.b16 %v2218, %v2217
    %v2229 = vpack.c.b16 %v2220, %v2219
    %v2230 = vpack.c.b16 %v2222, %v2221
    %2239 = vmatprep.subr.bf16.mxu0 0
    %2240 = vmatpush1.bf16.msra.mxu0 %v2223
    %2241 = vmatprep.subr.bf16.mxu0 0
    %2242 = vmatpush1.bf16.msra.mxu0 %v2224
    %2243 = vmatprep.subr.bf16.mxu0 0
    %2244 = vmatpush1.bf16.msra.mxu0 %v2225
    %2245 = vmatprep.subr.bf16.mxu0 0
    %2246 = vmatpush1.bf16.msra.mxu0 %v2226
    %2247 = vmatprep.subr.bf16.mxu0 0
    %2248 = vmatpush1.bf16.msra.mxu0 %v2227
    %2249 = vmatprep.subr.bf16.mxu0 0
    %2250 = vmatpush1.bf16.msra.mxu0 %v2228
    %2251 = vmatprep.subr.bf16.mxu0 0
    %2252 = vmatpush1.bf16.msra.mxu0 %v2229
    %2253 = vmatprep.subr.bf16.mxu0 0
    %2254 = vmatpush1.bf16.msra.mxu0 %v2230
    %2255 = vmatprep.subr.bf16.mxu0 0
    %2256 = vmatpush1.bf16.msra.mxu0 0
    %2257 = vmatprep.subr.bf16.mxu0 0
    %2258 = vmatpush1.bf16.msra.mxu0 0
    %2259 = vmatprep.subr.bf16.mxu0 0
    %2260 = vmatpush1.bf16.msra.mxu0 0
    %2261 = vmatprep.subr.bf16.mxu0 0
    %2262 = vmatpush1.bf16.msra.mxu0 0
    %2263 = vmatprep.subr.bf16.mxu0 0
    %2264 = vmatpush1.bf16.msra.mxu0 0
    %2265 = vmatprep.subr.bf16.mxu0 0
    %2266 = vmatpush1.bf16.msra.mxu0 0
    %2267 = vmatprep.subr.bf16.mxu0 0
    %2268 = vmatpush1.bf16.msra.mxu0 0
    %2269 = vmatprep.subr.bf16.mxu0 0
    %2270 = vmatpush1.bf16.msra.mxu0 0
    %2271 = vmatprep.mubr.bf16.mxu0 0
    %2272 = vmatmul.mubr.bf16.gmra.mrb[0].mxu0 %v2177
    %v2273 = vpop.f32.mrb[0].mxu0
    %v2274 = vadd.f32 %v2189, %v2273
    %v2275 = vpop.f32.mrb[0].mxu0
    %v2276 = vpop.f32.mrb[0].mxu0
    %v2277 = vadd.f32 %v2189, %v2276
    %v2278 = vpop.f32.mrb[0].mxu0
    %2279 = vmatprep.mubr.bf16.mxu0 0
    %2280 = vmatmul.mubr.bf16.gmra.mrb[0].mxu0 %v2178
    %v2281 = vpop.f32.mrb[0].mxu0
    %v2282 = vadd.f32 %v2189, %v2281
    %v2283 = vpop.f32.mrb[0].mxu0
    %v2284 = vpop.f32.mrb[0].mxu0
    %v2285 = vadd.f32 %v2189, %v2284
    %v2286 = vpop.f32.mrb[0].mxu0
    %2287 = vmatprep.mubr.bf16.mxu0 0
    %2288 = vmatmul.mubr.bf16.gmra.mrb[0].mxu0 %v2179
    %v2289 = vpop.f32.mrb[0].mxu0
    %v2290 = vadd.f32 %v2189, %v2289
    %v2291 = vpop.f32.mrb[0].mxu0
    %v2292 = vpop.f32.mrb[0].mxu0
    %v2293 = vadd.f32 %v2189, %v2292
    %v2294 = vpop.f32.mrb[0].mxu0
    %2295 = vmatprep.mubr.bf16.mxu0 0
    %2296 = vmatmul.mubr.bf16.gmra.mrb[0].mxu0 %v2180
    %v2297 = vpop.f32.mrb[0].mxu0
    %v2298 = vadd.f32 %v2189, %v2297
    %v2299 = vpop.f32.mrb[0].mxu0
    %v2300 = vpop.f32.mrb[0].mxu0
    %v2301 = vadd.f32 %v2189, %v2300
    %v2302 = vpop.f32.mrb[0].mxu0
    %2303 = vmatprep.mubr.bf16.mxu0 0
    %2304 = vmatmul.mubr.bf16.gmra.mrb[0].mxu0 %v2181
    %v2305 = vpop.f32.mrb[0].mxu0
    %v2306 = vadd.f32 %v2189, %v2305
    %v2307 = vpop.f32.mrb[0].mxu0
    %v2308 = vpop.f32.mrb[0].mxu0
    %v2309 = vadd.f32 %v2189, %v2308
    %v2310 = vpop.f32.mrb[0].mxu0
    %2311 = vmatprep.mubr.bf16.mxu0 0
    %2312 = vmatmul.mubr.bf16.gmra.mrb[0].mxu0 %v2182
    %v2313 = vpop.f32.mrb[0].mxu0
    %v2314 = vadd.f32 %v2189, %v2313
    %v2315 = vpop.f32.mrb[0].mxu0
    %v2316 = vpop.f32.mrb[0].mxu0
    %v2317 = vadd.f32 %v2189, %v2316
    %v2318 = vpop.f32.mrb[0].mxu0
    %2319 = vmatprep.mubr.bf16.mxu0 0
    %2320 = vmatmul.mubr.bf16.gmra.mrb[0].mxu0 %v2183
    %v2321 = vpop.f32.mrb[0].mxu0
    %v2322 = vadd.f32 %v2189, %v2321
    %v2323 = vpop.f32.mrb[0].mxu0
    %v2324 = vpop.f32.mrb[0].mxu0
    %v2325 = vadd.f32 %v2189, %v2324
    %v2326 = vpop.f32.mrb[0].mxu0
    %2327 = vmatprep.mubr.bf16.mxu0 0
    %2328 = vmatmul.mubr.bf16.gmra.mrb[0].mxu0 %v2184
    %v2329 = vpop.f32.mrb[0].mxu0
    %v2330 = vadd.f32 %v2189, %v2329
    %v2331 = vpop.f32.mrb[0].mxu0
    %v2332 = vpop.f32.mrb[0].mxu0
    %v2333 = vadd.f32 %v2189, %v2332
    %v2334 = vpop.f32.mrb[0].mxu0
    %2335 = vdwg.mxu0
    %v2336 = vmax.f32 %v2274, 0.0
    %v2337 = vmax.f32 %v2277, 0.0
    %v2338 = vmax.f32 %v2282, 0.0
    %v2339 = vmax.f32 %v2285, 0.0
    %v2340 = vmax.f32 %v2290, 0.0
    %v2341 = vmax.f32 %v2293, 0.0
    %v2342 = vmax.f32 %v2298, 0.0
    %v2343 = vmax.f32 %v2301, 0.0
    %v2344 = vmax.f32 %v2306, 0.0
    %v2345 = vmax.f32 %v2309, 0.0
    %v2346 = vmax.f32 %v2314, 0.0
    %v2347 = vmax.f32 %v2317, 0.0
    %v2348 = vmax.f32 %v2322, 0.0
    %v2349 = vmax.f32 %v2325, 0.0
    %v2350 = vmax.f32 %v2330, 0.0
    %v2351 = vmax.f32 %v2333, 0.0
    %v2352 = vunpack.c.l.bf16 %v1912
    %v2353 = vunpack.c.l.bf16 %v1913
    %v2354 = vunpack.c.l.bf16 %v1914
    %v2355 = vunpack.c.l.bf16 %v1915
    %v2356 = vunpack.c.l.bf16 %v1916
    %v2357 = vunpack.c.l.bf16 %v1917
    %v2358 = vunpack.c.l.bf16 %v1918
    %v2359 = vunpack.c.l.bf16 %v1919
    %v2360 = vunpack.c.l.bf16 %v1920
    %v2361 = vunpack.c.l.bf16 %v1921
    %v2362 = vunpack.c.l.bf16 %v1922
    %v2363 = vunpack.c.l.bf16 %v1923
    %v2364 = vunpack.c.l.bf16 %v1924
    %v2365 = vunpack.c.l.bf16 %v1925
    %v2366 = vunpack.c.l.bf16 %v1926
    %v2367 = vunpack.c.l.bf16 %v1927
    %v2368 = vadd.f32 %v2336, %v2352
    %v2369 = vadd.f32 %v2337, %v2353
    %v2370 = vadd.f32 %v2338, %v2354
    %v2371 = vadd.f32 %v2339, %v2355
    %v2372 = vadd.f32 %v2340, %v2356
    %v2373 = vadd.f32 %v2341, %v2357
    %v2374 = vadd.f32 %v2342, %v2358
    %v2375 = vadd.f32 %v2343, %v2359
    %v2376 = vadd.f32 %v2344, %v2360
    %v2377 = vadd.f32 %v2345, %v2361
    %v2378 = vadd.f32 %v2346, %v2362
    %v2379 = vadd.f32 %v2347, %v2363
    %v2380 = vadd.f32 %v2348, %v2364
    %v2381 = vadd.f32 %v2349, %v2365
    %v2382 = vadd.f32 %v2350, %v2366
    %v2383 = vadd.f32 %v2351, %v2367
    %v2384 = vld [vmem:[%s19] sm:$0xf]
    %v2385 = vpack.c.bf16 %v2369, %v2368
    %v2386 = vpack.c.bf16 %v2371, %v2370
    %v2387 = vpack.c.bf16 %v2373, %v2372
    %v2388 = vpack.c.bf16 %v2375, %v2374
    %v2389 = vpack.c.bf16 %v2377, %v2376
    %v2390 = vpack.c.bf16 %v2379, %v2378
    %v2391 = vpack.c.bf16 %v2381, %v2380
    %v2392 = vpack.c.bf16 %v2383, %v2382
    %2393 = vmatprep.subr.bf16.mxu0 0
    %2394 = vmatpush1.bf16.xpose.msra.mxu0 %v2385
    %2395 = vmatprep.subr.bf16.mxu0 0
    %2396 = vmatpush1.bf16.xpose.msra.mxu0 %v2386
    %2397 = vmatprep.subr.bf16.mxu0 0
    %2398 = vmatpush1.bf16.xpose.msra.mxu0 %v2387
    %2399 = vmatprep.subr.bf16.mxu0 0
    %2400 = vmatpush1.bf16.xpose.msra.mxu0 %v2388
    %2401 = vmatprep.subr.bf16.mxu0 0
    %2402 = vmatpush1.bf16.xpose.msra.mxu0 %v2389
    %2403 = vmatprep.subr.bf16.mxu0 0
    %2404 = vmatpush1.bf16.xpose.msra.mxu0 %v2390
    %2405 = vmatprep.subr.bf16.mxu0 0
    %2406 = vmatpush1.bf16.xpose.msra.mxu0 %v2391
    %2407 = vmatprep.subr.bf16.mxu0 0
    %2408 = vmatpush1.bf16.xpose.msra.mxu0 %v2392
    %2409 = vmatprep.subr.bf16.mxu0 0
    %2410 = vmatpush1.bf16.xpose.msra.mxu0 0
    %2411 = vmatprep.subr.bf16.mxu0 0
    %2412 = vmatpush1.bf16.xpose.msra.mxu0 0
    %2413 = vmatprep.subr.bf16.mxu0 0
    %2414 = vmatpush1.bf16.xpose.msra.mxu0 0
    %2415 = vmatprep.subr.bf16.mxu0 0
    %2416 = vmatpush1.bf16.xpose.msra.mxu0 0
    %2417 = vmatprep.subr.bf16.mxu0 0
    %2418 = vmatpush1.bf16.xpose.msra.mxu0 0
    %2419 = vmatprep.subr.bf16.mxu0 0
    %2420 = vmatpush1.bf16.xpose.msra.mxu0 0
    %2421 = vmatprep.subr.bf16.mxu0 0
    %2422 = vmatpush1.bf16.xpose.msra.mxu0 0
    %2423 = vmatprep.subr.bf16.mxu0 0
    %2424 = vmatpush1.bf16.xpose.msra.mxu0 0
    %2425 = vmatprep.mubr.bf16.mxu0 0
    %2426 = vmatmul.mubr.bf16.gmra.mrb[0].mxu0 %v2384
    %v2427 = vpop.f32.mrb[0].mxu0
    %v2428 = vadd.f32 0.0, %v2427
    %v2429 = vpop.f32.mrb[0].mxu0
    %v2430 = vpop.f32.mrb[0].mxu0
    %v2431 = vpop.f32.mrb[0].mxu0
    %2432 = vdwg.mxu0
    %vm2433 = vcmask 1040384
    %v2434 = vsel %vm2433, %v2428, -inf
    %2435 = vmax.xlane.f32.xlu0 %v2434
    %v2436 = vpop.xlane.xlu0 %2435
    %v2437 = vsub.f32 %v2428, %v2436
    %v2438 = vmul.f32 %v2437, 1.442695
    %v2439 = vpow.pop %v2438
    %v2440 = vsel %vm2433, %v2439, 0.0
    %2441 = vadd.xlane.f32.xlu0 %v2440
    %v2442 = vpop.xlane.xlu0 %2441
    %v2443 = vlog2.pop %v2442
    %v2444 = vmul.f32 %v2443, 0.6931472
    %v2445 = vadd.f32 %v2436, %v2444
    %v2446 = vsub.f32 %v2428, %v2445
    %2447 = vst [vmem:[%s22] sm:$0x1] %v2446
    // Predicated region
    $region90: #{mshmm_forward.1} parent=1 // pred_check
      _
    $region91: #{mshmm_forward.1} parent=1 // pred_check_branch
      %2449 = sbr.rel (0) target = $region93
    $region92: #{mshmm_forward.1} parent=1 // pred_region
      _
    $region93: #{mshmm_forward.1} parent=1 // pred_fallthru
      _
    // Predicated region
    $region94: #{mshmm_forward.1} parent=1 // pred_check
      _
    $region95: #{mshmm_forward.1} parent=1 // pred_check_branch
      %2451 = sbr.rel (0) target = $region97
    $region96: #{mshmm_forward.1} parent=1 // pred_region
      _
    $region97: #{mshmm_forward.1} parent=1 // pred_fallthru
      _
    // Predicated region
    $region98: #{mshmm_forward.1} parent=1 // pred_check
      _
    $region99: #{mshmm_forward.1} parent=1 // pred_check_branch
      %2453 = sbr.rel (0) target = $region101
    $region100: #{mshmm_forward.1} parent=1 // pred_region
      _
    $region101: #{mshmm_forward.1} parent=1 // pred_fallthru
      _
    // Predicated region
    $region102: #{mshmm_forward.1} parent=1 // pred_check
      _
    $region103: #{mshmm_forward.1} parent=1 // pred_check_branch
      %2455 = sbr.rel (0) target = $region105
    $region104: #{mshmm_forward.1} parent=1 // pred_region
      _
    $region105: #{mshmm_forward.1} parent=1 // pred_fallthru
      _
    // Predicated region
    $region106: #{mshmm_forward.1} parent=1 // pred_check
      _
    $region107: #{mshmm_forward.1} parent=1 // pred_check_branch
      %2457 = sbr.rel (0) target = $region109
    $region108: #{mshmm_forward.1} parent=1 // pred_region
      _
    $region109: #{mshmm_forward.1} parent=1 // pred_fallthru
      _
    // Predicated region
    $region110: #{mshmm_forward.1} parent=1 // pred_check
      _
    $region111: #{mshmm_forward.1} parent=1 // pred_check_branch
      %2459 = sbr.rel (0) target = $region113
    $region112: #{mshmm_forward.1} parent=1 // pred_region
      _
    $region113: #{mshmm_forward.1} parent=1 // pred_fallthru
      _
    %2460 = vsyncpa [#allocation3], 1
    %2461 = vsyncpa [#allocation5], 1

</llo_original>
